<compile_context>
chip_gen: v5e
topology: v5e:2x2
jax: 0.10.0
libtpu: 0.0.40
codegen_flags: <defaults>
</compile_context>

<pallas_src>
import functools

import jax
import jax.numpy as jnp
from jax.experimental import pallas as pl
from jax.experimental.pallas import tpu as pltpu

LANE = 128      # vreg lane width
SUBLANE = 8     # vreg sublane count


def _round_up(x, m):
    return (x + m - 1) // m * m


def _vmem_budget():
    """Physical VMEM per core minus headroom for Mosaic internals / pipeline."""
    try:
        info = pltpu.get_tpu_info()
        cap = int(getattr(info, "vmem_capacity_bytes", 128 << 20))
    except Exception:
        cap = 64 << 20                       # conservative fallback (v7x per-TC)
    return max(cap - (16 << 20), 16 << 20)


def _vmem_estimate(T, b_blk, in_dim, H, G, Op, layer_in_dims, cbytes):
    """Accurate-ish VMEM bytes: pipelined in/out tiles x 2 buffers, resident
    weights x 2 (default double-buffered), scratch x 1."""
    pipelined = 2 * (T * b_blk * in_dim * cbytes + T * b_blk * Op * 4)
    weights = 0
    for d in layer_in_dims:
        weights += d * G * cbytes + H * G * cbytes + G * 4
    weights += H * Op * cbytes + Op * 4
    weights *= 2
    scratch = T * b_blk * G * 4 + T * b_blk * H * cbytes
    return pipelined + weights + scratch


# --------------------------------------------------------------------------- #
# In-kernel LSTM layer recurrence (time-major), packed gates, bf16 matmuls.
# --------------------------------------------------------------------------- #
def _lstm_layer_recurrence(src_ref, wih_ref, whh_ref, b_ref, gx_ref, hseq_ref,
                           H, n_sub, unroll):
    # src_ref:  (T, Bb, Din) bf16   layer input (x tile, or previous hseq)
    # wih_ref:  (Din, 4H)    bf16   weight_ih^T, packed gate order [i,f,g,o]
    # whh_ref:  (H,   4H)    bf16   weight_hh^T
    # b_ref:    (1,   4H)    f32    b_ih + b_hh
    # gx_ref:   (T, Bb, 4H)  f32    scratch: hoisted input projection + bias
    # hseq_ref: (T, Bb, H)   bf16   scratch: per-timestep hidden outputs
    T, Bb, Din = src_ref.shape
    G = 4 * H
    cdt = whh_ref.dtype

    # Hoisted input projection: one big MXU matmul off the serial critical path.
    # src_ref is read in full here, so it may alias hseq_ref (layers > 0) which
    # is only overwritten inside the time loop below.
    gx = jnp.dot(src_ref[...].reshape(T * Bb, Din), wih_ref[...],
                 preferred_element_type=jnp.float32) + b_ref[...]
    gx_ref[...] = gx.reshape(T, Bb, G)

    sb = Bb // n_sub
    h0 = tuple(jnp.zeros((sb, H), jnp.float32) for _ in range(n_sub))
    c0 = tuple(jnp.zeros((sb, H), jnp.float32) for _ in range(n_sub))

    def step(t, carry):
        hs, cs = carry
        gx_t = gx_ref[t]                                    # (Bb, 4H) f32
        new_h, new_c = [], []
        for s in range(n_sub):                              # independent chains
            h, c = hs[s], cs[s]
            # Only the recurrent matmul stays on the serial critical path.
            gates = gx_t[s * sb:(s + 1) * sb, :] + jnp.dot(
                h.astype(cdt), whh_ref[...], preferred_element_type=jnp.float32)
            i = jax.nn.sigmoid(gates[:, 0 * H:1 * H])
            f = jax.nn.sigmoid(gates[:, 1 * H:2 * H])
            g = jnp.tanh(gates[:, 2 * H:3 * H])
            o = jax.nn.sigmoid(gates[:, 3 * H:4 * H])
            c_new = f * c + i * g                           # f32 elementwise
            h_new = o * jnp.tanh(c_new)
            new_h.append(h_new)
            new_c.append(c_new)
        h_cat = new_h[0] if n_sub == 1 else jnp.concatenate(new_h, axis=0)
        hseq_ref[t] = h_cat.astype(hseq_ref.dtype)
        return tuple(new_h), tuple(new_c)

    jax.lax.fori_loop(0, T, step, (h0, c0), unroll=unroll)


# --------------------------------------------------------------------------- #
# Fused kernel: all LSTM layers + FC + softmax over the time axis.
# --------------------------------------------------------------------------- #
def _fused_lstm_fc_softmax_kernel(num_layers, H, n_sub, unroll, *refs):
    x_ref = refs[0]
    layer_refs = [refs[1 + 3 * l: 4 + 3 * l] for l in range(num_layers)]
    fcw_ref, fcb_ref, out_ref, gx_ref, hseq_ref = refs[1 + 3 * num_layers:]

    T, Bb, _ = x_ref.shape

    # Stacked LSTM layers, all resident in VMEM (no HBM round trips).
    src_ref = x_ref
    for (wih_ref, whh_ref, b_ref) in layer_refs:
        _lstm_layer_recurrence(src_ref, wih_ref, whh_ref, b_ref,
                               gx_ref, hseq_ref, H, n_sub, unroll)
        src_ref = hseq_ref

    # FC epilogue: one (T*Bb, H) x (H, Op) bf16 matmul, f32 accumulate.
    Op = fcw_ref.shape[1]
    logits = jnp.dot(hseq_ref[...].reshape(T * Bb, H), fcw_ref[...],
                     preferred_element_type=jnp.float32) + fcb_ref[...]
    logits = logits.reshape(T, Bb, Op)

    # Softmax over the time axis (axis 0 here == dim=1 of the (B, T, O) output).
    m = jnp.max(logits, axis=0, keepdims=True)
    e = jnp.exp(logits - m)
    s = jnp.sum(e, axis=0, keepdims=True)
    out_ref[...] = e * pl.reciprocal(s, approx=True)        # EUP, not VALU divide


# --------------------------------------------------------------------------- #
# Parameter preparation: PyTorch layout -> transposed, packed, bf16 layout.
# --------------------------------------------------------------------------- #
def prepare_params(raw_lstm_layers, fc_weight, fc_bias, *,
                   compute_dtype=jnp.bfloat16):
    """raw_lstm_layers: list of (weight_ih (4H,Din), weight_hh (4H,H), b_ih, b_hh)."""
    layers = []
    for (w_ih, w_hh, b_ih, b_hh) in raw_lstm_layers:
        layers.append((
            w_ih.T.astype(compute_dtype),                       # (Din, 4H)
            w_hh.T.astype(compute_dtype),                       # (H,   4H)
            (b_ih + b_hh).reshape(1, -1).astype(jnp.float32),   # (1,   4H)
        ))
    O = fc_weight.shape[0]
    Op = _round_up(O, LANE)                                     # lane-dense output
    fcw = jnp.pad(fc_weight.T, ((0, 0), (0, Op - O))).astype(compute_dtype)
    fcb = jnp.pad(fc_bias.reshape(1, -1),
                  ((0, 0), (0, Op - O))).astype(jnp.float32)
    return layers, fcw, fcb


# --------------------------------------------------------------------------- #
# Full model forward.
# --------------------------------------------------------------------------- #
def _const_spec(shape):
    # Grid-resident (constant index_map) weight/bias block.
    return pl.BlockSpec(shape, lambda i, _n=len(shape): (0,) * _n)


@functools.partial(jax.jit, static_argnames=("output_dim",))
def lstm_classifier_forward(x, layer_params, fcw, fcb, *, output_dim):
    # x: (B, T, input_dim) batch-first, exactly like the PyTorch module.
    B, T, D = x.shape
    H = layer_params[0][1].shape[0]           # whh^T is (H, 4H)
    G = 4 * H
    Op = fcw.shape[1]
    num_layers = len(layer_params)
    cdt = fcw.dtype
    cbytes = jnp.dtype(cdt).itemsize
    layer_in_dims = [lp[0].shape[0] for lp in layer_params]

    # ---- batch block: aim for >= 2 grid blocks (megacore), cap at 256 rows,
    #      shrink until the VMEM estimate fits the device budget. ----
    Bp8 = _round_up(B, SUBLANE)
    if Bp8 <= SUBLANE:
        cands = [SUBLANE]
    else:
        pref = min(256, _round_up((Bp8 + 1) // 2, SUBLANE))
        cands = sorted({bb for bb in (pref, 256, 128, 64, 32, 16, 8)
                        if bb <= pref}, reverse=True)
    budget = _vmem_budget()
    b_blk = cands[-1]
    for bb in cands:
        if _vmem_estimate(T, bb, D, H, G, Op, layer_in_dims, cbytes) <= budget:
            b_blk = bb
            break
    Bp = _round_up(Bp8, b_blk)

    n_sub = 2 if (b_blk >= 16 and b_blk % 16 == 0) else 1
    unroll = True if T <= 32 else 8

    est = _vmem_estimate(T, b_blk, D, H, G, Op, layer_in_dims, cbytes)
    vmem_limit = int(min(max(est * 5 // 4 + (2 << 20), 32 << 20), budget))
    compiler_params = pltpu.CompilerParams(
        dimension_semantics=("parallel",),
        vmem_limit_bytes=vmem_limit,
    )

    # batch-first -> time-major; zero-pad batch to a multiple of b_blk; bf16.
    x_tm = jnp.transpose(x, (1, 0, 2)).astype(cdt)
    x_tm = jnp.pad(x_tm, ((0, 0), (0, Bp - B), (0, 0)))

    in_specs = [pl.BlockSpec((T, b_blk, D), lambda i: (0, i, 0))]
    flat_inputs = [x_tm]
    for (wih, whh, b) in layer_params:
        in_specs += [_const_spec(wih.shape), _const_spec(whh.shape),
                     _const_spec(b.shape)]
        flat_inputs += [wih, whh, b]
    in_specs += [_const_spec(fcw.shape), _const_spec(fcb.shape)]
    flat_inputs += [fcw, fcb]

    kernel = functools.partial(_fused_lstm_fc_softmax_kernel,
                               num_layers, H, n_sub, unroll)

    out_tm = pl.pallas_call(
        kernel,
        out_shape=jax.ShapeDtypeStruct((T, Bp, Op), jnp.float32),
        grid_spec=pltpu.PrefetchScalarGridSpec(
            num_scalar_prefetch=0,
            grid=(Bp // b_blk,),
            in_specs=in_specs,
            out_specs=pl.BlockSpec((T, b_blk, Op), lambda i: (0, i, 0)),
            scratch_shapes=[
                pltpu.VMEM((T, b_blk, G), jnp.float32),   # hoisted x @ W_ih + b
                pltpu.VMEM((T, b_blk, H), cdt),           # hidden slab (bf16)
            ],
        ),
        compiler_params=compiler_params,
    )(*flat_inputs)

    # Strip padding and return batch-first (B, T, output_dim).
    return jnp.transpose(out_tm[:, :B, :output_dim], (1, 0, 2))


# --------------------------------------------------------------------------- #
# Pure-JAX reference (PyTorch-layout params, f32) for correctness checking.
# --------------------------------------------------------------------------- #
def reference_forward(x, raw_lstm_layers, fc_weight, fc_bias):
    B, T, _ = x.shape
    seq = x
    for (w_ih, w_hh, b_ih, b_hh) in raw_lstm_layers:
        H = w_hh.shape[1]
        h = jnp.zeros((B, H), jnp.float32)
        c = jnp.zeros((B, H), jnp.float32)
        outs = []
        for t in range(T):
            gates = seq[:, t, :] @ w_ih.T + h @ w_hh.T + b_ih + b_hh
            i = jax.nn.sigmoid(gates[:, 0 * H:1 * H])
            f = jax.nn.sigmoid(gates[:, 1 * H:2 * H])
            g = jnp.tanh(gates[:, 2 * H:3 * H])
            o = jax.nn.sigmoid(gates[:, 3 * H:4 * H])
            c = f * c + i * g
            h = o * jnp.tanh(c)
            outs.append(h)
        seq = jnp.stack(outs, axis=1)
    logits = seq @ fc_weight.T + fc_bias
    return jax.nn.softmax(logits, axis=1)


if __name__ == "__main__":
    B, T = 2, 8
    INPUT_DIM, HIDDEN_DIM = 16, 32
    NUM_LAYERS, OUTPUT_DIM = 2, 8

    key = jax.random.PRNGKey(0)
    keys = iter(jax.random.split(key, 4 * NUM_LAYERS + 3))
    scale = 0.1

    # PyTorch-layout parameters (weight_ih: (4H, Din), weight_hh: (4H, H)).
    raw_layers = []
    for layer in range(NUM_LAYERS):
        d_in = INPUT_DIM if layer == 0 else HIDDEN_DIM
        w_ih = scale * jax.random.normal(next(keys), (4 * HIDDEN_DIM, d_in), jnp.float32)
        w_hh = scale * jax.random.normal(next(keys), (4 * HIDDEN_DIM, HIDDEN_DIM), jnp.float32)
        b_ih = scale * jax.random.normal(next(keys), (4 * HIDDEN_DIM,), jnp.float32)
        b_hh = scale * jax.random.normal(next(keys), (4 * HIDDEN_DIM,), jnp.float32)
        raw_layers.append((w_ih, w_hh, b_ih, b_hh))
    fc_w = scale * jax.random.normal(next(keys), (OUTPUT_DIM, HIDDEN_DIM), jnp.float32)
    fc_b = scale * jax.random.normal(next(keys), (OUTPUT_DIM,), jnp.float32)

    x = jax.random.normal(next(keys), (B, T, INPUT_DIM), jnp.float32)

    layer_params, fcw_p, fcb_p = prepare_params(raw_layers, fc_w, fc_b)
    out = lstm_classifier_forward(x, layer_params, fcw_p, fcb_p,
                                  output_dim=OUTPUT_DIM)
    out = jax.block_until_ready(out)

    ref = reference_forward(x, raw_layers, fc_w, fc_b)
    assert out.shape == (B, T, OUTPUT_DIM)
    max_err = float(jnp.max(jnp.abs(out - ref)))
    # Tolerance covers bf16 matmul operands (f32 accumulate) and the EUP
    # approximate reciprocal in the softmax.
    assert jnp.allclose(out, ref, atol=2e-2, rtol=2e-2), max_err

    print("KERNEL_OK")
</pallas_src>

<mosaic_0001>
module attributes {stable_mosaic.version = 11 : i64} {
  func.func @_fused_lstm_fc_softmax_kernel(%arg0: i32, %arg1: memref<8x8x16xbf16, #tpu.memory_space<vmem>>, %arg2: memref<16x128xbf16, #tpu.memory_space<vmem>>, %arg3: memref<32x128xbf16, #tpu.memory_space<vmem>>, %arg4: memref<1x128xf32, #tpu.memory_space<vmem>>, %arg5: memref<32x128xbf16, #tpu.memory_space<vmem>>, %arg6: memref<32x128xbf16, #tpu.memory_space<vmem>>, %arg7: memref<1x128xf32, #tpu.memory_space<vmem>>, %arg8: memref<32x128xbf16, #tpu.memory_space<vmem>>, %arg9: memref<1x128xf32, #tpu.memory_space<vmem>>, %arg10: memref<8x8x128xf32, #tpu.memory_space<vmem>>, %arg11: memref<8x8x128xf32, #tpu.memory_space<vmem>>, %arg12: memref<8x8x32xbf16, #tpu.memory_space<vmem>>) attributes {dimension_semantics = [#tpu.dimension_semantics<parallel>], iteration_bounds = array<i64: 1>, scalar_prefetch = 0 : i64, scratch_operands = 2 : i64, tpu.core_type = #tpu.core_type<tc>, window_params = [{transform_indices = @transform_0, window_bounds = array<i64: 8, 8, 16>}, {pipeline_mode = #tpu.pipeline_mode<synchronous>, transform_indices = @transform_1, window_bounds = array<i64: 16, 128>}, {pipeline_mode = #tpu.pipeline_mode<synchronous>, transform_indices = @transform_2, window_bounds = array<i64: 32, 128>}, {pipeline_mode = #tpu.pipeline_mode<synchronous>, transform_indices = @transform_3, window_bounds = array<i64: 1, 128>}, {pipeline_mode = #tpu.pipeline_mode<synchronous>, transform_indices = @transform_4, window_bounds = array<i64: 32, 128>}, {pipeline_mode = #tpu.pipeline_mode<synchronous>, transform_indices = @transform_5, window_bounds = array<i64: 32, 128>}, {pipeline_mode = #tpu.pipeline_mode<synchronous>, transform_indices = @transform_6, window_bounds = array<i64: 1, 128>}, {pipeline_mode = #tpu.pipeline_mode<synchronous>, transform_indices = @transform_7, window_bounds = array<i64: 32, 128>}, {pipeline_mode = #tpu.pipeline_mode<synchronous>, transform_indices = @transform_8, window_bounds = array<i64: 1, 128>}, {transform_indices = @transform_9, window_bounds = array<i64: 8, 8, 128>}]} {
    %c0 = arith.constant 0 : index
    %c0_0 = arith.constant 0 : index
    %c0_1 = arith.constant 0 : index
    %0 = vector.load %arg1[%c0, %c0_0, %c0_1] : memref<8x8x16xbf16, #tpu.memory_space<vmem>>, vector<8x8x16xbf16>
    %1 = vector.shape_cast %0 : vector<8x8x16xbf16> to vector<64x16xbf16>
    %c0_2 = arith.constant 0 : index
    %c0_3 = arith.constant 0 : index
    %2 = vector.load %arg2[%c0_2, %c0_3] : memref<16x128xbf16, #tpu.memory_space<vmem>>, vector<16x128xbf16>
    %cst = arith.constant dense<0.000000e+00> : vector<64x128xf32>
    %3 = tpu.matmul %1, %2, %cst {dimension_numbers = #tpu.dot_dimension_numbers<[1], [0], [0], [1], [0, 0, 1, 1], [], []>} : vector<64x16xbf16>, vector<16x128xbf16>, vector<64x128xf32> -> vector<64x128xf32>
    %c0_4 = arith.constant 0 : index
    %c0_5 = arith.constant 0 : index
    %4 = vector.load %arg4[%c0_4, %c0_5] : memref<1x128xf32, #tpu.memory_space<vmem>>, vector<1x128xf32>
    %5 = vector.broadcast %4 : vector<1x128xf32> to vector<64x128xf32>
    %6 = arith.addf %3, %5 : vector<64x128xf32>
    %7 = vector.shape_cast %6 : vector<64x128xf32> to vector<8x8x128xf32>
    %c0_6 = arith.constant 0 : index
    %c0_7 = arith.constant 0 : index
    %c0_8 = arith.constant 0 : index
    %8 = vector.load %arg11[%c0_6, %c0_7, %c0_8] : memref<8x8x128xf32, #tpu.memory_space<vmem>>, vector<8x8x128xf32>
    tpu.vector_store %arg11[%c0_6, %c0_7, %c0_8], %7 {strides = array<i32>} : memref<8x8x128xf32, #tpu.memory_space<vmem>>, vector<8x8x128xf32>,
    %cst_9 = arith.constant 0.000000e+00 : f32
    %9 = vector.broadcast %cst_9 : f32 to vector<8x32xf32>
    %cst_10 = arith.constant 0.000000e+00 : f32
    %10 = vector.broadcast %cst_10 : f32 to vector<8x32xf32>
    %c0_i32 = arith.constant 0 : i32
    %11 = arith.index_cast %c0_i32 : i32 to index
    %c0_11 = arith.constant 0 : index
    %c0_12 = arith.constant 0 : index
    %12 = vector.load %arg11[%11, %c0_11, %c0_12] : memref<8x8x128xf32, #tpu.memory_space<vmem>>, vector<1x8x128xf32>
    %13 = vector.shape_cast %12 : vector<1x8x128xf32> to vector<8x128xf32>
    %14 = arith.truncf %9 : vector<8x32xf32> to vector<8x32xbf16>
    %c0_13 = arith.constant 0 : index
    %c0_14 = arith.constant 0 : index
    %15 = vector.load %arg3[%c0_13, %c0_14] : memref<32x128xbf16, #tpu.memory_space<vmem>>, vector<32x128xbf16>
    %cst_15 = arith.constant dense<0.000000e+00> : vector<8x128xf32>
    %16 = tpu.matmul %14, %15, %cst_15 {dimension_numbers = #tpu.dot_dimension_numbers<[1], [0], [0], [1], [0, 0, 1, 1], [], []>} : vector<8x32xbf16>, vector<32x128xbf16>, vector<8x128xf32> -> vector<8x128xf32>
    %17 = arith.addf %13, %16 : vector<8x128xf32>
    %18 = vector.extract_strided_slice %17 {offsets = [0, 0], sizes = [8, 32], strides = [1, 1]} : vector<8x128xf32> to vector<8x32xf32>
    %19 = arith.negf %18 : vector<8x32xf32>
    %20 = math.exp %19 : vector<8x32xf32>
    %cst_16 = arith.constant 1.000000e+00 : f32
    %21 = vector.broadcast %cst_16 : f32 to vector<8x32xf32>
    %22 = arith.addf %21, %20 : vector<8x32xf32>
    %23 = arith.divf %21, %22 : vector<8x32xf32>
    %24 = vector.extract_strided_slice %17 {offsets = [0, 32], sizes = [8, 32], strides = [1, 1]} : vector<8x128xf32> to vector<8x32xf32>
    %25 = arith.negf %24 : vector<8x32xf32>
    %26 = math.exp %25 : vector<8x32xf32>
    %cst_17 = arith.constant 1.000000e+00 : f32
    %27 = vector.broadcast %cst_17 : f32 to vector<8x32xf32>
    %28 = arith.addf %27, %26 : vector<8x32xf32>
    %29 = arith.divf %27, %28 : vector<8x32xf32>
    %30 = vector.extract_strided_slice %17 {offsets = [0, 64], sizes = [8, 32], strides = [1, 1]} : vector<8x128xf32> to vector<8x32xf32>
    %31 = math.tanh %30 : vector<8x32xf32>
    %32 = vector.extract_strided_slice %17 {offsets = [0, 96], sizes = [8, 32], strides = [1, 1]} : vector<8x128xf32> to vector<8x32xf32>
    %33 = arith.negf %32 : vector<8x32xf32>
    %34 = math.exp %33 : vector<8x32xf32>
    %cst_18 = arith.constant 1.000000e+00 : f32
    %35 = vector.broadcast %cst_18 : f32 to vector<8x32xf32>
    %36 = arith.addf %35, %34 : vector<8x32xf32>
    %37 = arith.divf %35, %36 : vector<8x32xf32>
    %38 = arith.mulf %29, %10 : vector<8x32xf32>
    %39 = arith.mulf %23, %31 : vector<8x32xf32>
    %40 = arith.addf %38, %39 : vector<8x32xf32>
    %41 = math.tanh %40 : vector<8x32xf32>
    %42 = arith.mulf %37, %41 : vector<8x32xf32>
    %43 = arith.truncf %42 : vector<8x32xf32> to vector<8x32xbf16>
    %44 = arith.index_cast %c0_i32 : i32 to index
    %c0_19 = arith.constant 0 : index
    %c0_20 = arith.constant 0 : index
    %45 = vector.load %arg12[%44, %c0_19, %c0_20] : memref<8x8x32xbf16, #tpu.memory_space<vmem>>, vector<1x8x32xbf16>
    %46 = vector.shape_cast %45 : vector<1x8x32xbf16> to vector<8x32xbf16>
    %47 = vector.shape_cast %43 : vector<8x32xbf16> to vector<1x8x32xbf16>
    tpu.vector_store %arg12[%44, %c0_19, %c0_20], %47 {strides = array<i32>} : memref<8x8x32xbf16, #tpu.memory_space<vmem>>, vector<1x8x32xbf16>,
    %c1_i32 = arith.constant 1 : i32
    %48 = arith.index_cast %c1_i32 : i32 to index
    %c0_21 = arith.constant 0 : index
    %c0_22 = arith.constant 0 : index
    %49 = vector.load %arg11[%48, %c0_21, %c0_22] : memref<8x8x128xf32, #tpu.memory_space<vmem>>, vector<1x8x128xf32>
    %50 = vector.shape_cast %49 : vector<1x8x128xf32> to vector<8x128xf32>
    %51 = arith.truncf %42 : vector<8x32xf32> to vector<8x32xbf16>
    %c0_23 = arith.constant 0 : index
    %c0_24 = arith.constant 0 : index
    %52 = vector.load %arg3[%c0_23, %c0_24] : memref<32x128xbf16, #tpu.memory_space<vmem>>, vector<32x128xbf16>
    %cst_25 = arith.constant dense<0.000000e+00> : vector<8x128xf32>
    %53 = tpu.matmul %51, %52, %cst_25 {dimension_numbers = #tpu.dot_dimension_numbers<[1], [0], [0], [1], [0, 0, 1, 1], [], []>} : vector<8x32xbf16>, vector<32x128xbf16>, vector<8x128xf32> -> vector<8x128xf32>
    %54 = arith.addf %50, %53 : vector<8x128xf32>
    %55 = vector.extract_strided_slice %54 {offsets = [0, 0], sizes = [8, 32], strides = [1, 1]} : vector<8x128xf32> to vector<8x32xf32>
    %56 = arith.negf %55 : vector<8x32xf32>
    %57 = math.exp %56 : vector<8x32xf32>
    %cst_26 = arith.constant 1.000000e+00 : f32
    %58 = vector.broadcast %cst_26 : f32 to vector<8x32xf32>
    %59 = arith.addf %58, %57 : vector<8x32xf32>
    %60 = arith.divf %58, %59 : vector<8x32xf32>
    %61 = vector.extract_strided_slice %54 {offsets = [0, 32], sizes = [8, 32], strides = [1, 1]} : vector<8x128xf32> to vector<8x32xf32>
    %62 = arith.negf %61 : vector<8x32xf32>
    %63 = math.exp %62 : vector<8x32xf32>
    %cst_27 = arith.constant 1.000000e+00 : f32
    %64 = vector.broadcast %cst_27 : f32 to vector<8x32xf32>
    %65 = arith.addf %64, %63 : vector<8x32xf32>
    %66 = arith.divf %64, %65 : vector<8x32xf32>
    %67 = vector.extract_strided_slice %54 {offsets = [0, 64], sizes = [8, 32], strides = [1, 1]} : vector<8x128xf32> to vector<8x32xf32>
    %68 = math.tanh %67 : vector<8x32xf32>
    %69 = vector.extract_strided_slice %54 {offsets = [0, 96], sizes = [8, 32], strides = [1, 1]} : vector<8x128xf32> to vector<8x32xf32>
    %70 = arith.negf %69 : vector<8x32xf32>
    %71 = math.exp %70 : vector<8x32xf32>
    %cst_28 = arith.constant 1.000000e+00 : f32
    %72 = vector.broadcast %cst_28 : f32 to vector<8x32xf32>
    %73 = arith.addf %72, %71 : vector<8x32xf32>
    %74 = arith.divf %72, %73 : vector<8x32xf32>
    %75 = arith.mulf %66, %40 : vector<8x32xf32>
    %76 = arith.mulf %60, %68 : vector<8x32xf32>
    %77 = arith.addf %75, %76 : vector<8x32xf32>
    %78 = math.tanh %77 : vector<8x32xf32>
    %79 = arith.mulf %74, %78 : vector<8x32xf32>
    %80 = arith.truncf %79 : vector<8x32xf32> to vector<8x32xbf16>
    %81 = arith.index_cast %c1_i32 : i32 to index
    %c0_29 = arith.constant 0 : index
    %c0_30 = arith.constant 0 : index
    %82 = vector.load %arg12[%81, %c0_29, %c0_30] : memref<8x8x32xbf16, #tpu.memory_space<vmem>>, vector<1x8x32xbf16>
    %83 = vector.shape_cast %82 : vector<1x8x32xbf16> to vector<8x32xbf16>
    %84 = vector.shape_cast %80 : vector<8x32xbf16> to vector<1x8x32xbf16>
    tpu.vector_store %arg12[%81, %c0_29, %c0_30], %84 {strides = array<i32>} : memref<8x8x32xbf16, #tpu.memory_space<vmem>>, vector<1x8x32xbf16>,
    %c2_i32 = arith.constant 2 : i32
    %85 = arith.index_cast %c2_i32 : i32 to index
    %c0_31 = arith.constant 0 : index
    %c0_32 = arith.constant 0 : index
    %86 = vector.load %arg11[%85, %c0_31, %c0_32] : memref<8x8x128xf32, #tpu.memory_space<vmem>>, vector<1x8x128xf32>
    %87 = vector.shape_cast %86 : vector<1x8x128xf32> to vector<8x128xf32>
    %88 = arith.truncf %79 : vector<8x32xf32> to vector<8x32xbf16>
    %c0_33 = arith.constant 0 : index
    %c0_34 = arith.constant 0 : index
    %89 = vector.load %arg3[%c0_33, %c0_34] : memref<32x128xbf16, #tpu.memory_space<vmem>>, vector<32x128xbf16>
    %cst_35 = arith.constant dense<0.000000e+00> : vector<8x128xf32>
    %90 = tpu.matmul %88, %89, %cst_35 {dimension_numbers = #tpu.dot_dimension_numbers<[1], [0], [0], [1], [0, 0, 1, 1], [], []>} : vector<8x32xbf16>, vector<32x128xbf16>, vector<8x128xf32> -> vector<8x128xf32>
    %91 = arith.addf %87, %90 : vector<8x128xf32>
    %92 = vector.extract_strided_slice %91 {offsets = [0, 0], sizes = [8, 32], strides = [1, 1]} : vector<8x128xf32> to vector<8x32xf32>
    %93 = arith.negf %92 : vector<8x32xf32>
    %94 = math.exp %93 : vector<8x32xf32>
    %cst_36 = arith.constant 1.000000e+00 : f32
    %95 = vector.broadcast %cst_36 : f32 to vector<8x32xf32>
    %96 = arith.addf %95, %94 : vector<8x32xf32>
    %97 = arith.divf %95, %96 : vector<8x32xf32>
    %98 = vector.extract_strided_slice %91 {offsets = [0, 32], sizes = [8, 32], strides = [1, 1]} : vector<8x128xf32> to vector<8x32xf32>
    %99 = arith.negf %98 : vector<8x32xf32>
    %100 = math.exp %99 : vector<8x32xf32>
    %cst_37 = arith.constant 1.000000e+00 : f32
    %101 = vector.broadcast %cst_37 : f32 to vector<8x32xf32>
    %102 = arith.addf %101, %100 : vector<8x32xf32>
    %103 = arith.divf %101, %102 : vector<8x32xf32>
    %104 = vector.extract_strided_slice %91 {offsets = [0, 64], sizes = [8, 32], strides = [1, 1]} : vector<8x128xf32> to vector<8x32xf32>
    %105 = math.tanh %104 : vector<8x32xf32>
    %106 = vector.extract_strided_slice %91 {offsets = [0, 96], sizes = [8, 32], strides = [1, 1]} : vector<8x128xf32> to vector<8x32xf32>
    %107 = arith.negf %106 : vector<8x32xf32>
    %108 = math.exp %107 : vector<8x32xf32>
    %cst_38 = arith.constant 1.000000e+00 : f32
    %109 = vector.broadcast %cst_38 : f32 to vector<8x32xf32>
    %110 = arith.addf %109, %108 : vector<8x32xf32>
    %111 = arith.divf %109, %110 : vector<8x32xf32>
    %112 = arith.mulf %103, %77 : vector<8x32xf32>
    %113 = arith.mulf %97, %105 : vector<8x32xf32>
    %114 = arith.addf %112, %113 : vector<8x32xf32>
    %115 = math.tanh %114 : vector<8x32xf32>
    %116 = arith.mulf %111, %115 : vector<8x32xf32>
    %117 = arith.truncf %116 : vector<8x32xf32> to vector<8x32xbf16>
    %118 = arith.index_cast %c2_i32 : i32 to index
    %c0_39 = arith.constant 0 : index
    %c0_40 = arith.constant 0 : index
    %119 = vector.load %arg12[%118, %c0_39, %c0_40] : memref<8x8x32xbf16, #tpu.memory_space<vmem>>, vector<1x8x32xbf16>
    %120 = vector.shape_cast %119 : vector<1x8x32xbf16> to vector<8x32xbf16>
    %121 = vector.shape_cast %117 : vector<8x32xbf16> to vector<1x8x32xbf16>
    tpu.vector_store %arg12[%118, %c0_39, %c0_40], %121 {strides = array<i32>} : memref<8x8x32xbf16, #tpu.memory_space<vmem>>, vector<1x8x32xbf16>,
    %c3_i32 = arith.constant 3 : i32
    %122 = arith.index_cast %c3_i32 : i32 to index
    %c0_41 = arith.constant 0 : index
    %c0_42 = arith.constant 0 : index
    %123 = vector.load %arg11[%122, %c0_41, %c0_42] : memref<8x8x128xf32, #tpu.memory_space<vmem>>, vector<1x8x128xf32>
    %124 = vector.shape_cast %123 : vector<1x8x128xf32> to vector<8x128xf32>
    %125 = arith.truncf %116 : vector<8x32xf32> to vector<8x32xbf16>
    %c0_43 = arith.constant 0 : index
    %c0_44 = arith.constant 0 : index
    %126 = vector.load %arg3[%c0_43, %c0_44] : memref<32x128xbf16, #tpu.memory_space<vmem>>, vector<32x128xbf16>
    %cst_45 = arith.constant dense<0.000000e+00> : vector<8x128xf32>
    %127 = tpu.matmul %125, %126, %cst_45 {dimension_numbers = #tpu.dot_dimension_numbers<[1], [0], [0], [1], [0, 0, 1, 1], [], []>} : vector<8x32xbf16>, vector<32x128xbf16>, vector<8x128xf32> -> vector<8x128xf32>
    %128 = arith.addf %124, %127 : vector<8x128xf32>
    %129 = vector.extract_strided_slice %128 {offsets = [0, 0], sizes = [8, 32], strides = [1, 1]} : vector<8x128xf32> to vector<8x32xf32>
    %130 = arith.negf %129 : vector<8x32xf32>
    %131 = math.exp %130 : vector<8x32xf32>
    %cst_46 = arith.constant 1.000000e+00 : f32
    %132 = vector.broadcast %cst_46 : f32 to vector<8x32xf32>
    %133 = arith.addf %132, %131 : vector<8x32xf32>
    %134 = arith.divf %132, %133 : vector<8x32xf32>
    %135 = vector.extract_strided_slice %128 {offsets = [0, 32], sizes = [8, 32], strides = [1, 1]} : vector<8x128xf32> to vector<8x32xf32>
    %136 = arith.negf %135 : vector<8x32xf32>
    %137 = math.exp %136 : vector<8x32xf32>
    %cst_47 = arith.constant 1.000000e+00 : f32
    %138 = vector.broadcast %cst_47 : f32 to vector<8x32xf32>
    %139 = arith.addf %138, %137 : vector<8x32xf32>
    %140 = arith.divf %138, %139 : vector<8x32xf32>
    %141 = vector.extract_strided_slice %128 {offsets = [0, 64], sizes = [8, 32], strides = [1, 1]} : vector<8x128xf32> to vector<8x32xf32>
    %142 = math.tanh %141 : vector<8x32xf32>
    %143 = vector.extract_strided_slice %128 {offsets = [0, 96], sizes = [8, 32], strides = [1, 1]} : vector<8x128xf32> to vector<8x32xf32>
    %144 = arith.negf %143 : vector<8x32xf32>
    %145 = math.exp %144 : vector<8x32xf32>
    %cst_48 = arith.constant 1.000000e+00 : f32
    %146 = vector.broadcast %cst_48 : f32 to vector<8x32xf32>
    %147 = arith.addf %146, %145 : vector<8x32xf32>
    %148 = arith.divf %146, %147 : vector<8x32xf32>
    %149 = arith.mulf %140, %114 : vector<8x32xf32>
    %150 = arith.mulf %134, %142 : vector<8x32xf32>
    %151 = arith.addf %149, %150 : vector<8x32xf32>
    %152 = math.tanh %151 : vector<8x32xf32>
    %153 = arith.mulf %148, %152 : vector<8x32xf32>
    %154 = arith.truncf %153 : vector<8x32xf32> to vector<8x32xbf16>
    %155 = arith.index_cast %c3_i32 : i32 to index
    %c0_49 = arith.constant 0 : index
    %c0_50 = arith.constant 0 : index
    %156 = vector.load %arg12[%155, %c0_49, %c0_50] : memref<8x8x32xbf16, #tpu.memory_space<vmem>>, vector<1x8x32xbf16>
    %157 = vector.shape_cast %156 : vector<1x8x32xbf16> to vector<8x32xbf16>
    %158 = vector.shape_cast %154 : vector<8x32xbf16> to vector<1x8x32xbf16>
    tpu.vector_store %arg12[%155, %c0_49, %c0_50], %158 {strides = array<i32>} : memref<8x8x32xbf16, #tpu.memory_space<vmem>>, vector<1x8x32xbf16>,
    %c4_i32 = arith.constant 4 : i32
    %159 = arith.index_cast %c4_i32 : i32 to index
    %c0_51 = arith.constant 0 : index
    %c0_52 = arith.constant 0 : index
    %160 = vector.load %arg11[%159, %c0_51, %c0_52] : memref<8x8x128xf32, #tpu.memory_space<vmem>>, vector<1x8x128xf32>
    %161 = vector.shape_cast %160 : vector<1x8x128xf32> to vector<8x128xf32>
    %162 = arith.truncf %153 : vector<8x32xf32> to vector<8x32xbf16>
    %c0_53 = arith.constant 0 : index
    %c0_54 = arith.constant 0 : index
    %163 = vector.load %arg3[%c0_53, %c0_54] : memref<32x128xbf16, #tpu.memory_space<vmem>>, vector<32x128xbf16>
    %cst_55 = arith.constant dense<0.000000e+00> : vector<8x128xf32>
    %164 = tpu.matmul %162, %163, %cst_55 {dimension_numbers = #tpu.dot_dimension_numbers<[1], [0], [0], [1], [0, 0, 1, 1], [], []>} : vector<8x32xbf16>, vector<32x128xbf16>, vector<8x128xf32> -> vector<8x128xf32>
    %165 = arith.addf %161, %164 : vector<8x128xf32>
    %166 = vector.extract_strided_slice %165 {offsets = [0, 0], sizes = [8, 32], strides = [1, 1]} : vector<8x128xf32> to vector<8x32xf32>
    %167 = arith.negf %166 : vector<8x32xf32>
    %168 = math.exp %167 : vector<8x32xf32>
    %cst_56 = arith.constant 1.000000e+00 : f32
    %169 = vector.broadcast %cst_56 : f32 to vector<8x32xf32>
    %170 = arith.addf %169, %168 : vector<8x32xf32>
    %171 = arith.divf %169, %170 : vector<8x32xf32>
    %172 = vector.extract_strided_slice %165 {offsets = [0, 32], sizes = [8, 32], strides = [1, 1]} : vector<8x128xf32> to vector<8x32xf32>
    %173 = arith.negf %172 : vector<8x32xf32>
    %174 = math.exp %173 : vector<8x32xf32>
    %cst_57 = arith.constant 1.000000e+00 : f32
    %175 = vector.broadcast %cst_57 : f32 to vector<8x32xf32>
    %176 = arith.addf %175, %174 : vector<8x32xf32>
    %177 = arith.divf %175, %176 : vector<8x32xf32>
    %178 = vector.extract_strided_slice %165 {offsets = [0, 64], sizes = [8, 32], strides = [1, 1]} : vector<8x128xf32> to vector<8x32xf32>
    %179 = math.tanh %178 : vector<8x32xf32>
    %180 = vector.extract_strided_slice %165 {offsets = [0, 96], sizes = [8, 32], strides = [1, 1]} : vector<8x128xf32> to vector<8x32xf32>
    %181 = arith.negf %180 : vector<8x32xf32>
    %182 = math.exp %181 : vector<8x32xf32>
    %cst_58 = arith.constant 1.000000e+00 : f32
    %183 = vector.broadcast %cst_58 : f32 to vector<8x32xf32>
    %184 = arith.addf %183, %182 : vector<8x32xf32>
    %185 = arith.divf %183, %184 : vector<8x32xf32>
    %186 = arith.mulf %177, %151 : vector<8x32xf32>
    %187 = arith.mulf %171, %179 : vector<8x32xf32>
    %188 = arith.addf %186, %187 : vector<8x32xf32>
    %189 = math.tanh %188 : vector<8x32xf32>
    %190 = arith.mulf %185, %189 : vector<8x32xf32>
    %191 = arith.truncf %190 : vector<8x32xf32> to vector<8x32xbf16>
    %192 = arith.index_cast %c4_i32 : i32 to index
    %c0_59 = arith.constant 0 : index
    %c0_60 = arith.constant 0 : index
    %193 = vector.load %arg12[%192, %c0_59, %c0_60] : memref<8x8x32xbf16, #tpu.memory_space<vmem>>, vector<1x8x32xbf16>
    %194 = vector.shape_cast %193 : vector<1x8x32xbf16> to vector<8x32xbf16>
    %195 = vector.shape_cast %191 : vector<8x32xbf16> to vector<1x8x32xbf16>
    tpu.vector_store %arg12[%192, %c0_59, %c0_60], %195 {strides = array<i32>} : memref<8x8x32xbf16, #tpu.memory_space<vmem>>, vector<1x8x32xbf16>,
    %c5_i32 = arith.constant 5 : i32
    %196 = arith.index_cast %c5_i32 : i32 to index
    %c0_61 = arith.constant 0 : index
    %c0_62 = arith.constant 0 : index
    %197 = vector.load %arg11[%196, %c0_61, %c0_62] : memref<8x8x128xf32, #tpu.memory_space<vmem>>, vector<1x8x128xf32>
    %198 = vector.shape_cast %197 : vector<1x8x128xf32> to vector<8x128xf32>
    %199 = arith.truncf %190 : vector<8x32xf32> to vector<8x32xbf16>
    %c0_63 = arith.constant 0 : index
    %c0_64 = arith.constant 0 : index
    %200 = vector.load %arg3[%c0_63, %c0_64] : memref<32x128xbf16, #tpu.memory_space<vmem>>, vector<32x128xbf16>
    %cst_65 = arith.constant dense<0.000000e+00> : vector<8x128xf32>
    %201 = tpu.matmul %199, %200, %cst_65 {dimension_numbers = #tpu.dot_dimension_numbers<[1], [0], [0], [1], [0, 0, 1, 1], [], []>} : vector<8x32xbf16>, vector<32x128xbf16>, vector<8x128xf32> -> vector<8x128xf32>
    %202 = arith.addf %198, %201 : vector<8x128xf32>
    %203 = vector.extract_strided_slice %202 {offsets = [0, 0], sizes = [8, 32], strides = [1, 1]} : vector<8x128xf32> to vector<8x32xf32>
    %204 = arith.negf %203 : vector<8x32xf32>
    %205 = math.exp %204 : vector<8x32xf32>
    %cst_66 = arith.constant 1.000000e+00 : f32
    %206 = vector.broadcast %cst_66 : f32 to vector<8x32xf32>
    %207 = arith.addf %206, %205 : vector<8x32xf32>
    %208 = arith.divf %206, %207 : vector<8x32xf32>
    %209 = vector.extract_strided_slice %202 {offsets = [0, 32], sizes = [8, 32], strides = [1, 1]} : vector<8x128xf32> to vector<8x32xf32>
    %210 = arith.negf %209 : vector<8x32xf32>
    %211 = math.exp %210 : vector<8x32xf32>
    %cst_67 = arith.constant 1.000000e+00 : f32
    %212 = vector.broadcast %cst_67 : f32 to vector<8x32xf32>
    %213 = arith.addf %212, %211 : vector<8x32xf32>
    %214 = arith.divf %212, %213 : vector<8x32xf32>
    %215 = vector.extract_strided_slice %202 {offsets = [0, 64], sizes = [8, 32], strides = [1, 1]} : vector<8x128xf32> to vector<8x32xf32>
    %216 = math.tanh %215 : vector<8x32xf32>
    %217 = vector.extract_strided_slice %202 {offsets = [0, 96], sizes = [8, 32], strides = [1, 1]} : vector<8x128xf32> to vector<8x32xf32>
    %218 = arith.negf %217 : vector<8x32xf32>
    %219 = math.exp %218 : vector<8x32xf32>
    %cst_68 = arith.constant 1.000000e+00 : f32
    %220 = vector.broadcast %cst_68 : f32 to vector<8x32xf32>
    %221 = arith.addf %220, %219 : vector<8x32xf32>
    %222 = arith.divf %220, %221 : vector<8x32xf32>
    %223 = arith.mulf %214, %188 : vector<8x32xf32>
    %224 = arith.mulf %208, %216 : vector<8x32xf32>
    %225 = arith.addf %223, %224 : vector<8x32xf32>
    %226 = math.tanh %225 : vector<8x32xf32>
    %227 = arith.mulf %222, %226 : vector<8x32xf32>
    %228 = arith.truncf %227 : vector<8x32xf32> to vector<8x32xbf16>
    %229 = arith.index_cast %c5_i32 : i32 to index
    %c0_69 = arith.constant 0 : index
    %c0_70 = arith.constant 0 : index
    %230 = vector.load %arg12[%229, %c0_69, %c0_70] : memref<8x8x32xbf16, #tpu.memory_space<vmem>>, vector<1x8x32xbf16>
    %231 = vector.shape_cast %230 : vector<1x8x32xbf16> to vector<8x32xbf16>
    %232 = vector.shape_cast %228 : vector<8x32xbf16> to vector<1x8x32xbf16>
    tpu.vector_store %arg12[%229, %c0_69, %c0_70], %232 {strides = array<i32>} : memref<8x8x32xbf16, #tpu.memory_space<vmem>>, vector<1x8x32xbf16>,
    %c6_i32 = arith.constant 6 : i32
    %233 = arith.index_cast %c6_i32 : i32 to index
    %c0_71 = arith.constant 0 : index
    %c0_72 = arith.constant 0 : index
    %234 = vector.load %arg11[%233, %c0_71, %c0_72] : memref<8x8x128xf32, #tpu.memory_space<vmem>>, vector<1x8x128xf32>
    %235 = vector.shape_cast %234 : vector<1x8x128xf32> to vector<8x128xf32>
    %236 = arith.truncf %227 : vector<8x32xf32> to vector<8x32xbf16>
    %c0_73 = arith.constant 0 : index
    %c0_74 = arith.constant 0 : index
    %237 = vector.load %arg3[%c0_73, %c0_74] : memref<32x128xbf16, #tpu.memory_space<vmem>>, vector<32x128xbf16>
    %cst_75 = arith.constant dense<0.000000e+00> : vector<8x128xf32>
    %238 = tpu.matmul %236, %237, %cst_75 {dimension_numbers = #tpu.dot_dimension_numbers<[1], [0], [0], [1], [0, 0, 1, 1], [], []>} : vector<8x32xbf16>, vector<32x128xbf16>, vector<8x128xf32> -> vector<8x128xf32>
    %239 = arith.addf %235, %238 : vector<8x128xf32>
    %240 = vector.extract_strided_slice %239 {offsets = [0, 0], sizes = [8, 32], strides = [1, 1]} : vector<8x128xf32> to vector<8x32xf32>
    %241 = arith.negf %240 : vector<8x32xf32>
    %242 = math.exp %241 : vector<8x32xf32>
    %cst_76 = arith.constant 1.000000e+00 : f32
    %243 = vector.broadcast %cst_76 : f32 to vector<8x32xf32>
    %244 = arith.addf %243, %242 : vector<8x32xf32>
    %245 = arith.divf %243, %244 : vector<8x32xf32>
    %246 = vector.extract_strided_slice %239 {offsets = [0, 32], sizes = [8, 32], strides = [1, 1]} : vector<8x128xf32> to vector<8x32xf32>
    %247 = arith.negf %246 : vector<8x32xf32>
    %248 = math.exp %247 : vector<8x32xf32>
    %cst_77 = arith.constant 1.000000e+00 : f32
    %249 = vector.broadcast %cst_77 : f32 to vector<8x32xf32>
    %250 = arith.addf %249, %248 : vector<8x32xf32>
    %251 = arith.divf %249, %250 : vector<8x32xf32>
    %252 = vector.extract_strided_slice %239 {offsets = [0, 64], sizes = [8, 32], strides = [1, 1]} : vector<8x128xf32> to vector<8x32xf32>
    %253 = math.tanh %252 : vector<8x32xf32>
    %254 = vector.extract_strided_slice %239 {offsets = [0, 96], sizes = [8, 32], strides = [1, 1]} : vector<8x128xf32> to vector<8x32xf32>
    %255 = arith.negf %254 : vector<8x32xf32>
    %256 = math.exp %255 : vector<8x32xf32>
    %cst_78 = arith.constant 1.000000e+00 : f32
    %257 = vector.broadcast %cst_78 : f32 to vector<8x32xf32>
    %258 = arith.addf %257, %256 : vector<8x32xf32>
    %259 = arith.divf %257, %258 : vector<8x32xf32>
    %260 = arith.mulf %251, %225 : vector<8x32xf32>
    %261 = arith.mulf %245, %253 : vector<8x32xf32>
    %262 = arith.addf %260, %261 : vector<8x32xf32>
    %263 = math.tanh %262 : vector<8x32xf32>
    %264 = arith.mulf %259, %263 : vector<8x32xf32>
    %265 = arith.truncf %264 : vector<8x32xf32> to vector<8x32xbf16>
    %266 = arith.index_cast %c6_i32 : i32 to index
    %c0_79 = arith.constant 0 : index
    %c0_80 = arith.constant 0 : index
    %267 = vector.load %arg12[%266, %c0_79, %c0_80] : memref<8x8x32xbf16, #tpu.memory_space<vmem>>, vector<1x8x32xbf16>
    %268 = vector.shape_cast %267 : vector<1x8x32xbf16> to vector<8x32xbf16>
    %269 = vector.shape_cast %265 : vector<8x32xbf16> to vector<1x8x32xbf16>
    tpu.vector_store %arg12[%266, %c0_79, %c0_80], %269 {strides = array<i32>} : memref<8x8x32xbf16, #tpu.memory_space<vmem>>, vector<1x8x32xbf16>,
    %c7_i32 = arith.constant 7 : i32
    %270 = arith.index_cast %c7_i32 : i32 to index
    %c0_81 = arith.constant 0 : index
    %c0_82 = arith.constant 0 : index
    %271 = vector.load %arg11[%270, %c0_81, %c0_82] : memref<8x8x128xf32, #tpu.memory_space<vmem>>, vector<1x8x128xf32>
    %272 = vector.shape_cast %271 : vector<1x8x128xf32> to vector<8x128xf32>
    %273 = arith.truncf %264 : vector<8x32xf32> to vector<8x32xbf16>
    %c0_83 = arith.constant 0 : index
    %c0_84 = arith.constant 0 : index
    %274 = vector.load %arg3[%c0_83, %c0_84] : memref<32x128xbf16, #tpu.memory_space<vmem>>, vector<32x128xbf16>
    %cst_85 = arith.constant dense<0.000000e+00> : vector<8x128xf32>
    %275 = tpu.matmul %273, %274, %cst_85 {dimension_numbers = #tpu.dot_dimension_numbers<[1], [0], [0], [1], [0, 0, 1, 1], [], []>} : vector<8x32xbf16>, vector<32x128xbf16>, vector<8x128xf32> -> vector<8x128xf32>
    %276 = arith.addf %272, %275 : vector<8x128xf32>
    %277 = vector.extract_strided_slice %276 {offsets = [0, 0], sizes = [8, 32], strides = [1, 1]} : vector<8x128xf32> to vector<8x32xf32>
    %278 = arith.negf %277 : vector<8x32xf32>
    %279 = math.exp %278 : vector<8x32xf32>
    %cst_86 = arith.constant 1.000000e+00 : f32
    %280 = vector.broadcast %cst_86 : f32 to vector<8x32xf32>
    %281 = arith.addf %280, %279 : vector<8x32xf32>
    %282 = arith.divf %280, %281 : vector<8x32xf32>
    %283 = vector.extract_strided_slice %276 {offsets = [0, 32], sizes = [8, 32], strides = [1, 1]} : vector<8x128xf32> to vector<8x32xf32>
    %284 = arith.negf %283 : vector<8x32xf32>
    %285 = math.exp %284 : vector<8x32xf32>
    %cst_87 = arith.constant 1.000000e+00 : f32
    %286 = vector.broadcast %cst_87 : f32 to vector<8x32xf32>
    %287 = arith.addf %286, %285 : vector<8x32xf32>
    %288 = arith.divf %286, %287 : vector<8x32xf32>
    %289 = vector.extract_strided_slice %276 {offsets = [0, 64], sizes = [8, 32], strides = [1, 1]} : vector<8x128xf32> to vector<8x32xf32>
    %290 = math.tanh %289 : vector<8x32xf32>
    %291 = vector.extract_strided_slice %276 {offsets = [0, 96], sizes = [8, 32], strides = [1, 1]} : vector<8x128xf32> to vector<8x32xf32>
    %292 = arith.negf %291 : vector<8x32xf32>
    %293 = math.exp %292 : vector<8x32xf32>
    %cst_88 = arith.constant 1.000000e+00 : f32
    %294 = vector.broadcast %cst_88 : f32 to vector<8x32xf32>
    %295 = arith.addf %294, %293 : vector<8x32xf32>
    %296 = arith.divf %294, %295 : vector<8x32xf32>
    %297 = arith.mulf %288, %262 : vector<8x32xf32>
    %298 = arith.mulf %282, %290 : vector<8x32xf32>
    %299 = arith.addf %297, %298 : vector<8x32xf32>
    %300 = math.tanh %299 : vector<8x32xf32>
    %301 = arith.mulf %296, %300 : vector<8x32xf32>
    %302 = arith.truncf %301 : vector<8x32xf32> to vector<8x32xbf16>
    %303 = arith.index_cast %c7_i32 : i32 to index
    %c0_89 = arith.constant 0 : index
    %c0_90 = arith.constant 0 : index
    %304 = vector.load %arg12[%303, %c0_89, %c0_90] : memref<8x8x32xbf16, #tpu.memory_space<vmem>>, vector<1x8x32xbf16>
    %305 = vector.shape_cast %304 : vector<1x8x32xbf16> to vector<8x32xbf16>
    %306 = vector.shape_cast %302 : vector<8x32xbf16> to vector<1x8x32xbf16>
    tpu.vector_store %arg12[%303, %c0_89, %c0_90], %306 {strides = array<i32>} : memref<8x8x32xbf16, #tpu.memory_space<vmem>>, vector<1x8x32xbf16>,
    %c8_i32 = arith.constant 8 : i32
    %c0_91 = arith.constant 0 : index
    %c0_92 = arith.constant 0 : index
    %c0_93 = arith.constant 0 : index
    %307 = vector.load %arg12[%c0_91, %c0_92, %c0_93] : memref<8x8x32xbf16, #tpu.memory_space<vmem>>, vector<8x8x32xbf16>
    %308 = vector.shape_cast %307 : vector<8x8x32xbf16> to vector<64x32xbf16>
    %c0_94 = arith.constant 0 : index
    %c0_95 = arith.constant 0 : index
    %309 = vector.load %arg5[%c0_94, %c0_95] : memref<32x128xbf16, #tpu.memory_space<vmem>>, vector<32x128xbf16>
    %cst_96 = arith.constant dense<0.000000e+00> : vector<64x128xf32>
    %310 = tpu.matmul %308, %309, %cst_96 {dimension_numbers = #tpu.dot_dimension_numbers<[1], [0], [0], [1], [0, 0, 1, 1], [], []>} : vector<64x32xbf16>, vector<32x128xbf16>, vector<64x128xf32> -> vector<64x128xf32>
    %c0_97 = arith.constant 0 : index
    %c0_98 = arith.constant 0 : index
    %311 = vector.load %arg7[%c0_97, %c0_98] : memref<1x128xf32, #tpu.memory_space<vmem>>, vector<1x128xf32>
    %312 = vector.broadcast %311 : vector<1x128xf32> to vector<64x128xf32>
    %313 = arith.addf %310, %312 : vector<64x128xf32>
    %314 = vector.shape_cast %313 : vector<64x128xf32> to vector<8x8x128xf32>
    %c0_99 = arith.constant 0 : index
    %c0_100 = arith.constant 0 : index
    %c0_101 = arith.constant 0 : index
    %315 = vector.load %arg11[%c0_99, %c0_100, %c0_101] : memref<8x8x128xf32, #tpu.memory_space<vmem>>, vector<8x8x128xf32>
    tpu.vector_store %arg11[%c0_99, %c0_100, %c0_101], %314 {strides = array<i32>} : memref<8x8x128xf32, #tpu.memory_space<vmem>>, vector<8x8x128xf32>,
    %cst_102 = arith.constant 0.000000e+00 : f32
    %316 = vector.broadcast %cst_102 : f32 to vector<8x32xf32>
    %cst_103 = arith.constant 0.000000e+00 : f32
    %317 = vector.broadcast %cst_103 : f32 to vector<8x32xf32>
    %c0_i32_104 = arith.constant 0 : i32
    %318 = arith.index_cast %c0_i32_104 : i32 to index
    %c0_105 = arith.constant 0 : index
    %c0_106 = arith.constant 0 : index
    %319 = vector.load %arg11[%318, %c0_105, %c0_106] : memref<8x8x128xf32, #tpu.memory_space<vmem>>, vector<1x8x128xf32>
    %320 = vector.shape_cast %319 : vector<1x8x128xf32> to vector<8x128xf32>
    %321 = arith.truncf %316 : vector<8x32xf32> to vector<8x32xbf16>
    %c0_107 = arith.constant 0 : index
    %c0_108 = arith.constant 0 : index
    %322 = vector.load %arg6[%c0_107, %c0_108] : memref<32x128xbf16, #tpu.memory_space<vmem>>, vector<32x128xbf16>
    %cst_109 = arith.constant dense<0.000000e+00> : vector<8x128xf32>
    %323 = tpu.matmul %321, %322, %cst_109 {dimension_numbers = #tpu.dot_dimension_numbers<[1], [0], [0], [1], [0, 0, 1, 1], [], []>} : vector<8x32xbf16>, vector<32x128xbf16>, vector<8x128xf32> -> vector<8x128xf32>
    %324 = arith.addf %320, %323 : vector<8x128xf32>
    %325 = vector.extract_strided_slice %324 {offsets = [0, 0], sizes = [8, 32], strides = [1, 1]} : vector<8x128xf32> to vector<8x32xf32>
    %326 = arith.negf %325 : vector<8x32xf32>
    %327 = math.exp %326 : vector<8x32xf32>
    %cst_110 = arith.constant 1.000000e+00 : f32
    %328 = vector.broadcast %cst_110 : f32 to vector<8x32xf32>
    %329 = arith.addf %328, %327 : vector<8x32xf32>
    %330 = arith.divf %328, %329 : vector<8x32xf32>
    %331 = vector.extract_strided_slice %324 {offsets = [0, 32], sizes = [8, 32], strides = [1, 1]} : vector<8x128xf32> to vector<8x32xf32>
    %332 = arith.negf %331 : vector<8x32xf32>
    %333 = math.exp %332 : vector<8x32xf32>
    %cst_111 = arith.constant 1.000000e+00 : f32
    %334 = vector.broadcast %cst_111 : f32 to vector<8x32xf32>
    %335 = arith.addf %334, %333 : vector<8x32xf32>
    %336 = arith.divf %334, %335 : vector<8x32xf32>
    %337 = vector.extract_strided_slice %324 {offsets = [0, 64], sizes = [8, 32], strides = [1, 1]} : vector<8x128xf32> to vector<8x32xf32>
    %338 = math.tanh %337 : vector<8x32xf32>
    %339 = vector.extract_strided_slice %324 {offsets = [0, 96], sizes = [8, 32], strides = [1, 1]} : vector<8x128xf32> to vector<8x32xf32>
    %340 = arith.negf %339 : vector<8x32xf32>
    %341 = math.exp %340 : vector<8x32xf32>
    %cst_112 = arith.constant 1.000000e+00 : f32
    %342 = vector.broadcast %cst_112 : f32 to vector<8x32xf32>
    %343 = arith.addf %342, %341 : vector<8x32xf32>
    %344 = arith.divf %342, %343 : vector<8x32xf32>
    %345 = arith.mulf %336, %317 : vector<8x32xf32>
    %346 = arith.mulf %330, %338 : vector<8x32xf32>
    %347 = arith.addf %345, %346 : vector<8x32xf32>
    %348 = math.tanh %347 : vector<8x32xf32>
    %349 = arith.mulf %344, %348 : vector<8x32xf32>
    %350 = arith.truncf %349 : vector<8x32xf32> to vector<8x32xbf16>
    %351 = arith.index_cast %c0_i32_104 : i32 to index
    %c0_113 = arith.constant 0 : index
    %c0_114 = arith.constant 0 : index
    %352 = vector.load %arg12[%351, %c0_113, %c0_114] : memref<8x8x32xbf16, #tpu.memory_space<vmem>>, vector<1x8x32xbf16>
    %353 = vector.shape_cast %352 : vector<1x8x32xbf16> to vector<8x32xbf16>
    %354 = vector.shape_cast %350 : vector<8x32xbf16> to vector<1x8x32xbf16>
    tpu.vector_store %arg12[%351, %c0_113, %c0_114], %354 {strides = array<i32>} : memref<8x8x32xbf16, #tpu.memory_space<vmem>>, vector<1x8x32xbf16>,
    %c1_i32_115 = arith.constant 1 : i32
    %355 = arith.index_cast %c1_i32_115 : i32 to index
    %c0_116 = arith.constant 0 : index
    %c0_117 = arith.constant 0 : index
    %356 = vector.load %arg11[%355, %c0_116, %c0_117] : memref<8x8x128xf32, #tpu.memory_space<vmem>>, vector<1x8x128xf32>
    %357 = vector.shape_cast %356 : vector<1x8x128xf32> to vector<8x128xf32>
    %358 = arith.truncf %349 : vector<8x32xf32> to vector<8x32xbf16>
    %c0_118 = arith.constant 0 : index
    %c0_119 = arith.constant 0 : index
    %359 = vector.load %arg6[%c0_118, %c0_119] : memref<32x128xbf16, #tpu.memory_space<vmem>>, vector<32x128xbf16>
    %cst_120 = arith.constant dense<0.000000e+00> : vector<8x128xf32>
    %360 = tpu.matmul %358, %359, %cst_120 {dimension_numbers = #tpu.dot_dimension_numbers<[1], [0], [0], [1], [0, 0, 1, 1], [], []>} : vector<8x32xbf16>, vector<32x128xbf16>, vector<8x128xf32> -> vector<8x128xf32>
    %361 = arith.addf %357, %360 : vector<8x128xf32>
    %362 = vector.extract_strided_slice %361 {offsets = [0, 0], sizes = [8, 32], strides = [1, 1]} : vector<8x128xf32> to vector<8x32xf32>
    %363 = arith.negf %362 : vector<8x32xf32>
    %364 = math.exp %363 : vector<8x32xf32>
    %cst_121 = arith.constant 1.000000e+00 : f32
    %365 = vector.broadcast %cst_121 : f32 to vector<8x32xf32>
    %366 = arith.addf %365, %364 : vector<8x32xf32>
    %367 = arith.divf %365, %366 : vector<8x32xf32>
    %368 = vector.extract_strided_slice %361 {offsets = [0, 32], sizes = [8, 32], strides = [1, 1]} : vector<8x128xf32> to vector<8x32xf32>
    %369 = arith.negf %368 : vector<8x32xf32>
    %370 = math.exp %369 : vector<8x32xf32>
    %cst_122 = arith.constant 1.000000e+00 : f32
    %371 = vector.broadcast %cst_122 : f32 to vector<8x32xf32>
    %372 = arith.addf %371, %370 : vector<8x32xf32>
    %373 = arith.divf %371, %372 : vector<8x32xf32>
    %374 = vector.extract_strided_slice %361 {offsets = [0, 64], sizes = [8, 32], strides = [1, 1]} : vector<8x128xf32> to vector<8x32xf32>
    %375 = math.tanh %374 : vector<8x32xf32>
    %376 = vector.extract_strided_slice %361 {offsets = [0, 96], sizes = [8, 32], strides = [1, 1]} : vector<8x128xf32> to vector<8x32xf32>
    %377 = arith.negf %376 : vector<8x32xf32>
    %378 = math.exp %377 : vector<8x32xf32>
    %cst_123 = arith.constant 1.000000e+00 : f32
    %379 = vector.broadcast %cst_123 : f32 to vector<8x32xf32>
    %380 = arith.addf %379, %378 : vector<8x32xf32>
    %381 = arith.divf %379, %380 : vector<8x32xf32>
    %382 = arith.mulf %373, %347 : vector<8x32xf32>
    %383 = arith.mulf %367, %375 : vector<8x32xf32>
    %384 = arith.addf %382, %383 : vector<8x32xf32>
    %385 = math.tanh %384 : vector<8x32xf32>
    %386 = arith.mulf %381, %385 : vector<8x32xf32>
    %387 = arith.truncf %386 : vector<8x32xf32> to vector<8x32xbf16>
    %388 = arith.index_cast %c1_i32_115 : i32 to index
    %c0_124 = arith.constant 0 : index
    %c0_125 = arith.constant 0 : index
    %389 = vector.load %arg12[%388, %c0_124, %c0_125] : memref<8x8x32xbf16, #tpu.memory_space<vmem>>, vector<1x8x32xbf16>
    %390 = vector.shape_cast %389 : vector<1x8x32xbf16> to vector<8x32xbf16>
    %391 = vector.shape_cast %387 : vector<8x32xbf16> to vector<1x8x32xbf16>
    tpu.vector_store %arg12[%388, %c0_124, %c0_125], %391 {strides = array<i32>} : memref<8x8x32xbf16, #tpu.memory_space<vmem>>, vector<1x8x32xbf16>,
    %c2_i32_126 = arith.constant 2 : i32
    %392 = arith.index_cast %c2_i32_126 : i32 to index
    %c0_127 = arith.constant 0 : index
    %c0_128 = arith.constant 0 : index
    %393 = vector.load %arg11[%392, %c0_127, %c0_128] : memref<8x8x128xf32, #tpu.memory_space<vmem>>, vector<1x8x128xf32>
    %394 = vector.shape_cast %393 : vector<1x8x128xf32> to vector<8x128xf32>
    %395 = arith.truncf %386 : vector<8x32xf32> to vector<8x32xbf16>
    %c0_129 = arith.constant 0 : index
    %c0_130 = arith.constant 0 : index
    %396 = vector.load %arg6[%c0_129, %c0_130] : memref<32x128xbf16, #tpu.memory_space<vmem>>, vector<32x128xbf16>
    %cst_131 = arith.constant dense<0.000000e+00> : vector<8x128xf32>
    %397 = tpu.matmul %395, %396, %cst_131 {dimension_numbers = #tpu.dot_dimension_numbers<[1], [0], [0], [1], [0, 0, 1, 1], [], []>} : vector<8x32xbf16>, vector<32x128xbf16>, vector<8x128xf32> -> vector<8x128xf32>
    %398 = arith.addf %394, %397 : vector<8x128xf32>
    %399 = vector.extract_strided_slice %398 {offsets = [0, 0], sizes = [8, 32], strides = [1, 1]} : vector<8x128xf32> to vector<8x32xf32>
    %400 = arith.negf %399 : vector<8x32xf32>
    %401 = math.exp %400 : vector<8x32xf32>
    %cst_132 = arith.constant 1.000000e+00 : f32
    %402 = vector.broadcast %cst_132 : f32 to vector<8x32xf32>
    %403 = arith.addf %402, %401 : vector<8x32xf32>
    %404 = arith.divf %402, %403 : vector<8x32xf32>
    %405 = vector.extract_strided_slice %398 {offsets = [0, 32], sizes = [8, 32], strides = [1, 1]} : vector<8x128xf32> to vector<8x32xf32>
    %406 = arith.negf %405 : vector<8x32xf32>
    %407 = math.exp %406 : vector<8x32xf32>
    %cst_133 = arith.constant 1.000000e+00 : f32
    %408 = vector.broadcast %cst_133 : f32 to vector<8x32xf32>
    %409 = arith.addf %408, %407 : vector<8x32xf32>
    %410 = arith.divf %408, %409 : vector<8x32xf32>
    %411 = vector.extract_strided_slice %398 {offsets = [0, 64], sizes = [8, 32], strides = [1, 1]} : vector<8x128xf32> to vector<8x32xf32>
    %412 = math.tanh %411 : vector<8x32xf32>
    %413 = vector.extract_strided_slice %398 {offsets = [0, 96], sizes = [8, 32], strides = [1, 1]} : vector<8x128xf32> to vector<8x32xf32>
    %414 = arith.negf %413 : vector<8x32xf32>
    %415 = math.exp %414 : vector<8x32xf32>
    %cst_134 = arith.constant 1.000000e+00 : f32
    %416 = vector.broadcast %cst_134 : f32 to vector<8x32xf32>
    %417 = arith.addf %416, %415 : vector<8x32xf32>
    %418 = arith.divf %416, %417 : vector<8x32xf32>
    %419 = arith.mulf %410, %384 : vector<8x32xf32>
    %420 = arith.mulf %404, %412 : vector<8x32xf32>
    %421 = arith.addf %419, %420 : vector<8x32xf32>
    %422 = math.tanh %421 : vector<8x32xf32>
    %423 = arith.mulf %418, %422 : vector<8x32xf32>
    %424 = arith.truncf %423 : vector<8x32xf32> to vector<8x32xbf16>
    %425 = arith.index_cast %c2_i32_126 : i32 to index
    %c0_135 = arith.constant 0 : index
    %c0_136 = arith.constant 0 : index
    %426 = vector.load %arg12[%425, %c0_135, %c0_136] : memref<8x8x32xbf16, #tpu.memory_space<vmem>>, vector<1x8x32xbf16>
    %427 = vector.shape_cast %426 : vector<1x8x32xbf16> to vector<8x32xbf16>
    %428 = vector.shape_cast %424 : vector<8x32xbf16> to vector<1x8x32xbf16>
    tpu.vector_store %arg12[%425, %c0_135, %c0_136], %428 {strides = array<i32>} : memref<8x8x32xbf16, #tpu.memory_space<vmem>>, vector<1x8x32xbf16>,
    %c3_i32_137 = arith.constant 3 : i32
    %429 = arith.index_cast %c3_i32_137 : i32 to index
    %c0_138 = arith.constant 0 : index
    %c0_139 = arith.constant 0 : index
    %430 = vector.load %arg11[%429, %c0_138, %c0_139] : memref<8x8x128xf32, #tpu.memory_space<vmem>>, vector<1x8x128xf32>
    %431 = vector.shape_cast %430 : vector<1x8x128xf32> to vector<8x128xf32>
    %432 = arith.truncf %423 : vector<8x32xf32> to vector<8x32xbf16>
    %c0_140 = arith.constant 0 : index
    %c0_141 = arith.constant 0 : index
    %433 = vector.load %arg6[%c0_140, %c0_141] : memref<32x128xbf16, #tpu.memory_space<vmem>>, vector<32x128xbf16>
    %cst_142 = arith.constant dense<0.000000e+00> : vector<8x128xf32>
    %434 = tpu.matmul %432, %433, %cst_142 {dimension_numbers = #tpu.dot_dimension_numbers<[1], [0], [0], [1], [0, 0, 1, 1], [], []>} : vector<8x32xbf16>, vector<32x128xbf16>, vector<8x128xf32> -> vector<8x128xf32>
    %435 = arith.addf %431, %434 : vector<8x128xf32>
    %436 = vector.extract_strided_slice %435 {offsets = [0, 0], sizes = [8, 32], strides = [1, 1]} : vector<8x128xf32> to vector<8x32xf32>
    %437 = arith.negf %436 : vector<8x32xf32>
    %438 = math.exp %437 : vector<8x32xf32>
    %cst_143 = arith.constant 1.000000e+00 : f32
    %439 = vector.broadcast %cst_143 : f32 to vector<8x32xf32>
    %440 = arith.addf %439, %438 : vector<8x32xf32>
    %441 = arith.divf %439, %440 : vector<8x32xf32>
    %442 = vector.extract_strided_slice %435 {offsets = [0, 32], sizes = [8, 32], strides = [1, 1]} : vector<8x128xf32> to vector<8x32xf32>
    %443 = arith.negf %442 : vector<8x32xf32>
    %444 = math.exp %443 : vector<8x32xf32>
    %cst_144 = arith.constant 1.000000e+00 : f32
    %445 = vector.broadcast %cst_144 : f32 to vector<8x32xf32>
    %446 = arith.addf %445, %444 : vector<8x32xf32>
    %447 = arith.divf %445, %446 : vector<8x32xf32>
    %448 = vector.extract_strided_slice %435 {offsets = [0, 64], sizes = [8, 32], strides = [1, 1]} : vector<8x128xf32> to vector<8x32xf32>
    %449 = math.tanh %448 : vector<8x32xf32>
    %450 = vector.extract_strided_slice %435 {offsets = [0, 96], sizes = [8, 32], strides = [1, 1]} : vector<8x128xf32> to vector<8x32xf32>
    %451 = arith.negf %450 : vector<8x32xf32>
    %452 = math.exp %451 : vector<8x32xf32>
    %cst_145 = arith.constant 1.000000e+00 : f32
    %453 = vector.broadcast %cst_145 : f32 to vector<8x32xf32>
    %454 = arith.addf %453, %452 : vector<8x32xf32>
    %455 = arith.divf %453, %454 : vector<8x32xf32>
    %456 = arith.mulf %447, %421 : vector<8x32xf32>
    %457 = arith.mulf %441, %449 : vector<8x32xf32>
    %458 = arith.addf %456, %457 : vector<8x32xf32>
    %459 = math.tanh %458 : vector<8x32xf32>
    %460 = arith.mulf %455, %459 : vector<8x32xf32>
    %461 = arith.truncf %460 : vector<8x32xf32> to vector<8x32xbf16>
    %462 = arith.index_cast %c3_i32_137 : i32 to index
    %c0_146 = arith.constant 0 : index
    %c0_147 = arith.constant 0 : index
    %463 = vector.load %arg12[%462, %c0_146, %c0_147] : memref<8x8x32xbf16, #tpu.memory_space<vmem>>, vector<1x8x32xbf16>
    %464 = vector.shape_cast %463 : vector<1x8x32xbf16> to vector<8x32xbf16>
    %465 = vector.shape_cast %461 : vector<8x32xbf16> to vector<1x8x32xbf16>
    tpu.vector_store %arg12[%462, %c0_146, %c0_147], %465 {strides = array<i32>} : memref<8x8x32xbf16, #tpu.memory_space<vmem>>, vector<1x8x32xbf16>,
    %c4_i32_148 = arith.constant 4 : i32
    %466 = arith.index_cast %c4_i32_148 : i32 to index
    %c0_149 = arith.constant 0 : index
    %c0_150 = arith.constant 0 : index
    %467 = vector.load %arg11[%466, %c0_149, %c0_150] : memref<8x8x128xf32, #tpu.memory_space<vmem>>, vector<1x8x128xf32>
    %468 = vector.shape_cast %467 : vector<1x8x128xf32> to vector<8x128xf32>
    %469 = arith.truncf %460 : vector<8x32xf32> to vector<8x32xbf16>
    %c0_151 = arith.constant 0 : index
    %c0_152 = arith.constant 0 : index
    %470 = vector.load %arg6[%c0_151, %c0_152] : memref<32x128xbf16, #tpu.memory_space<vmem>>, vector<32x128xbf16>
    %cst_153 = arith.constant dense<0.000000e+00> : vector<8x128xf32>
    %471 = tpu.matmul %469, %470, %cst_153 {dimension_numbers = #tpu.dot_dimension_numbers<[1], [0], [0], [1], [0, 0, 1, 1], [], []>} : vector<8x32xbf16>, vector<32x128xbf16>, vector<8x128xf32> -> vector<8x128xf32>
    %472 = arith.addf %468, %471 : vector<8x128xf32>
    %473 = vector.extract_strided_slice %472 {offsets = [0, 0], sizes = [8, 32], strides = [1, 1]} : vector<8x128xf32> to vector<8x32xf32>
    %474 = arith.negf %473 : vector<8x32xf32>
    %475 = math.exp %474 : vector<8x32xf32>
    %cst_154 = arith.constant 1.000000e+00 : f32
    %476 = vector.broadcast %cst_154 : f32 to vector<8x32xf32>
    %477 = arith.addf %476, %475 : vector<8x32xf32>
    %478 = arith.divf %476, %477 : vector<8x32xf32>
    %479 = vector.extract_strided_slice %472 {offsets = [0, 32], sizes = [8, 32], strides = [1, 1]} : vector<8x128xf32> to vector<8x32xf32>
    %480 = arith.negf %479 : vector<8x32xf32>
    %481 = math.exp %480 : vector<8x32xf32>
    %cst_155 = arith.constant 1.000000e+00 : f32
    %482 = vector.broadcast %cst_155 : f32 to vector<8x32xf32>
    %483 = arith.addf %482, %481 : vector<8x32xf32>
    %484 = arith.divf %482, %483 : vector<8x32xf32>
    %485 = vector.extract_strided_slice %472 {offsets = [0, 64], sizes = [8, 32], strides = [1, 1]} : vector<8x128xf32> to vector<8x32xf32>
    %486 = math.tanh %485 : vector<8x32xf32>
    %487 = vector.extract_strided_slice %472 {offsets = [0, 96], sizes = [8, 32], strides = [1, 1]} : vector<8x128xf32> to vector<8x32xf32>
    %488 = arith.negf %487 : vector<8x32xf32>
    %489 = math.exp %488 : vector<8x32xf32>
    %cst_156 = arith.constant 1.000000e+00 : f32
    %490 = vector.broadcast %cst_156 : f32 to vector<8x32xf32>
    %491 = arith.addf %490, %489 : vector<8x32xf32>
    %492 = arith.divf %490, %491 : vector<8x32xf32>
    %493 = arith.mulf %484, %458 : vector<8x32xf32>
    %494 = arith.mulf %478, %486 : vector<8x32xf32>
    %495 = arith.addf %493, %494 : vector<8x32xf32>
    %496 = math.tanh %495 : vector<8x32xf32>
    %497 = arith.mulf %492, %496 : vector<8x32xf32>
    %498 = arith.truncf %497 : vector<8x32xf32> to vector<8x32xbf16>
    %499 = arith.index_cast %c4_i32_148 : i32 to index
    %c0_157 = arith.constant 0 : index
    %c0_158 = arith.constant 0 : index
    %500 = vector.load %arg12[%499, %c0_157, %c0_158] : memref<8x8x32xbf16, #tpu.memory_space<vmem>>, vector<1x8x32xbf16>
    %501 = vector.shape_cast %500 : vector<1x8x32xbf16> to vector<8x32xbf16>
    %502 = vector.shape_cast %498 : vector<8x32xbf16> to vector<1x8x32xbf16>
    tpu.vector_store %arg12[%499, %c0_157, %c0_158], %502 {strides = array<i32>} : memref<8x8x32xbf16, #tpu.memory_space<vmem>>, vector<1x8x32xbf16>,
    %c5_i32_159 = arith.constant 5 : i32
    %503 = arith.index_cast %c5_i32_159 : i32 to index
    %c0_160 = arith.constant 0 : index
    %c0_161 = arith.constant 0 : index
    %504 = vector.load %arg11[%503, %c0_160, %c0_161] : memref<8x8x128xf32, #tpu.memory_space<vmem>>, vector<1x8x128xf32>
    %505 = vector.shape_cast %504 : vector<1x8x128xf32> to vector<8x128xf32>
    %506 = arith.truncf %497 : vector<8x32xf32> to vector<8x32xbf16>
    %c0_162 = arith.constant 0 : index
    %c0_163 = arith.constant 0 : index
    %507 = vector.load %arg6[%c0_162, %c0_163] : memref<32x128xbf16, #tpu.memory_space<vmem>>, vector<32x128xbf16>
    %cst_164 = arith.constant dense<0.000000e+00> : vector<8x128xf32>
    %508 = tpu.matmul %506, %507, %cst_164 {dimension_numbers = #tpu.dot_dimension_numbers<[1], [0], [0], [1], [0, 0, 1, 1], [], []>} : vector<8x32xbf16>, vector<32x128xbf16>, vector<8x128xf32> -> vector<8x128xf32>
    %509 = arith.addf %505, %508 : vector<8x128xf32>
    %510 = vector.extract_strided_slice %509 {offsets = [0, 0], sizes = [8, 32], strides = [1, 1]} : vector<8x128xf32> to vector<8x32xf32>
    %511 = arith.negf %510 : vector<8x32xf32>
    %512 = math.exp %511 : vector<8x32xf32>
    %cst_165 = arith.constant 1.000000e+00 : f32
    %513 = vector.broadcast %cst_165 : f32 to vector<8x32xf32>
    %514 = arith.addf %513, %512 : vector<8x32xf32>
    %515 = arith.divf %513, %514 : vector<8x32xf32>
    %516 = vector.extract_strided_slice %509 {offsets = [0, 32], sizes = [8, 32], strides = [1, 1]} : vector<8x128xf32> to vector<8x32xf32>
    %517 = arith.negf %516 : vector<8x32xf32>
    %518 = math.exp %517 : vector<8x32xf32>
    %cst_166 = arith.constant 1.000000e+00 : f32
    %519 = vector.broadcast %cst_166 : f32 to vector<8x32xf32>
    %520 = arith.addf %519, %518 : vector<8x32xf32>
    %521 = arith.divf %519, %520 : vector<8x32xf32>
    %522 = vector.extract_strided_slice %509 {offsets = [0, 64], sizes = [8, 32], strides = [1, 1]} : vector<8x128xf32> to vector<8x32xf32>
    %523 = math.tanh %522 : vector<8x32xf32>
    %524 = vector.extract_strided_slice %509 {offsets = [0, 96], sizes = [8, 32], strides = [1, 1]} : vector<8x128xf32> to vector<8x32xf32>
    %525 = arith.negf %524 : vector<8x32xf32>
    %526 = math.exp %525 : vector<8x32xf32>
    %cst_167 = arith.constant 1.000000e+00 : f32
    %527 = vector.broadcast %cst_167 : f32 to vector<8x32xf32>
    %528 = arith.addf %527, %526 : vector<8x32xf32>
    %529 = arith.divf %527, %528 : vector<8x32xf32>
    %530 = arith.mulf %521, %495 : vector<8x32xf32>
    %531 = arith.mulf %515, %523 : vector<8x32xf32>
    %532 = arith.addf %530, %531 : vector<8x32xf32>
    %533 = math.tanh %532 : vector<8x32xf32>
    %534 = arith.mulf %529, %533 : vector<8x32xf32>
    %535 = arith.truncf %534 : vector<8x32xf32> to vector<8x32xbf16>
    %536 = arith.index_cast %c5_i32_159 : i32 to index
    %c0_168 = arith.constant 0 : index
    %c0_169 = arith.constant 0 : index
    %537 = vector.load %arg12[%536, %c0_168, %c0_169] : memref<8x8x32xbf16, #tpu.memory_space<vmem>>, vector<1x8x32xbf16>
    %538 = vector.shape_cast %537 : vector<1x8x32xbf16> to vector<8x32xbf16>
    %539 = vector.shape_cast %535 : vector<8x32xbf16> to vector<1x8x32xbf16>
    tpu.vector_store %arg12[%536, %c0_168, %c0_169], %539 {strides = array<i32>} : memref<8x8x32xbf16, #tpu.memory_space<vmem>>, vector<1x8x32xbf16>,
    %c6_i32_170 = arith.constant 6 : i32
    %540 = arith.index_cast %c6_i32_170 : i32 to index
    %c0_171 = arith.constant 0 : index
    %c0_172 = arith.constant 0 : index
    %541 = vector.load %arg11[%540, %c0_171, %c0_172] : memref<8x8x128xf32, #tpu.memory_space<vmem>>, vector<1x8x128xf32>
    %542 = vector.shape_cast %541 : vector<1x8x128xf32> to vector<8x128xf32>
    %543 = arith.truncf %534 : vector<8x32xf32> to vector<8x32xbf16>
    %c0_173 = arith.constant 0 : index
    %c0_174 = arith.constant 0 : index
    %544 = vector.load %arg6[%c0_173, %c0_174] : memref<32x128xbf16, #tpu.memory_space<vmem>>, vector<32x128xbf16>
    %cst_175 = arith.constant dense<0.000000e+00> : vector<8x128xf32>
    %545 = tpu.matmul %543, %544, %cst_175 {dimension_numbers = #tpu.dot_dimension_numbers<[1], [0], [0], [1], [0, 0, 1, 1], [], []>} : vector<8x32xbf16>, vector<32x128xbf16>, vector<8x128xf32> -> vector<8x128xf32>
    %546 = arith.addf %542, %545 : vector<8x128xf32>
    %547 = vector.extract_strided_slice %546 {offsets = [0, 0], sizes = [8, 32], strides = [1, 1]} : vector<8x128xf32> to vector<8x32xf32>
    %548 = arith.negf %547 : vector<8x32xf32>
    %549 = math.exp %548 : vector<8x32xf32>
    %cst_176 = arith.constant 1.000000e+00 : f32
    %550 = vector.broadcast %cst_176 : f32 to vector<8x32xf32>
    %551 = arith.addf %550, %549 : vector<8x32xf32>
    %552 = arith.divf %550, %551 : vector<8x32xf32>
    %553 = vector.extract_strided_slice %546 {offsets = [0, 32], sizes = [8, 32], strides = [1, 1]} : vector<8x128xf32> to vector<8x32xf32>
    %554 = arith.negf %553 : vector<8x32xf32>
    %555 = math.exp %554 : vector<8x32xf32>
    %cst_177 = arith.constant 1.000000e+00 : f32
    %556 = vector.broadcast %cst_177 : f32 to vector<8x32xf32>
    %557 = arith.addf %556, %555 : vector<8x32xf32>
    %558 = arith.divf %556, %557 : vector<8x32xf32>
    %559 = vector.extract_strided_slice %546 {offsets = [0, 64], sizes = [8, 32], strides = [1, 1]} : vector<8x128xf32> to vector<8x32xf32>
    %560 = math.tanh %559 : vector<8x32xf32>
    %561 = vector.extract_strided_slice %546 {offsets = [0, 96], sizes = [8, 32], strides = [1, 1]} : vector<8x128xf32> to vector<8x32xf32>
    %562 = arith.negf %561 : vector<8x32xf32>
    %563 = math.exp %562 : vector<8x32xf32>
    %cst_178 = arith.constant 1.000000e+00 : f32
    %564 = vector.broadcast %cst_178 : f32 to vector<8x32xf32>
    %565 = arith.addf %564, %563 : vector<8x32xf32>
    %566 = arith.divf %564, %565 : vector<8x32xf32>
    %567 = arith.mulf %558, %532 : vector<8x32xf32>
    %568 = arith.mulf %552, %560 : vector<8x32xf32>
    %569 = arith.addf %567, %568 : vector<8x32xf32>
    %570 = math.tanh %569 : vector<8x32xf32>
    %571 = arith.mulf %566, %570 : vector<8x32xf32>
    %572 = arith.truncf %571 : vector<8x32xf32> to vector<8x32xbf16>
    %573 = arith.index_cast %c6_i32_170 : i32 to index
    %c0_179 = arith.constant 0 : index
    %c0_180 = arith.constant 0 : index
    %574 = vector.load %arg12[%573, %c0_179, %c0_180] : memref<8x8x32xbf16, #tpu.memory_space<vmem>>, vector<1x8x32xbf16>
    %575 = vector.shape_cast %574 : vector<1x8x32xbf16> to vector<8x32xbf16>
    %576 = vector.shape_cast %572 : vector<8x32xbf16> to vector<1x8x32xbf16>
    tpu.vector_store %arg12[%573, %c0_179, %c0_180], %576 {strides = array<i32>} : memref<8x8x32xbf16, #tpu.memory_space<vmem>>, vector<1x8x32xbf16>,
    %c7_i32_181 = arith.constant 7 : i32
    %577 = arith.index_cast %c7_i32_181 : i32 to index
    %c0_182 = arith.constant 0 : index
    %c0_183 = arith.constant 0 : index
    %578 = vector.load %arg11[%577, %c0_182, %c0_183] : memref<8x8x128xf32, #tpu.memory_space<vmem>>, vector<1x8x128xf32>
    %579 = vector.shape_cast %578 : vector<1x8x128xf32> to vector<8x128xf32>
    %580 = arith.truncf %571 : vector<8x32xf32> to vector<8x32xbf16>
    %c0_184 = arith.constant 0 : index
    %c0_185 = arith.constant 0 : index
    %581 = vector.load %arg6[%c0_184, %c0_185] : memref<32x128xbf16, #tpu.memory_space<vmem>>, vector<32x128xbf16>
    %cst_186 = arith.constant dense<0.000000e+00> : vector<8x128xf32>
    %582 = tpu.matmul %580, %581, %cst_186 {dimension_numbers = #tpu.dot_dimension_numbers<[1], [0], [0], [1], [0, 0, 1, 1], [], []>} : vector<8x32xbf16>, vector<32x128xbf16>, vector<8x128xf32> -> vector<8x128xf32>
    %583 = arith.addf %579, %582 : vector<8x128xf32>
    %584 = vector.extract_strided_slice %583 {offsets = [0, 0], sizes = [8, 32], strides = [1, 1]} : vector<8x128xf32> to vector<8x32xf32>
    %585 = arith.negf %584 : vector<8x32xf32>
    %586 = math.exp %585 : vector<8x32xf32>
    %cst_187 = arith.constant 1.000000e+00 : f32
    %587 = vector.broadcast %cst_187 : f32 to vector<8x32xf32>
    %588 = arith.addf %587, %586 : vector<8x32xf32>
    %589 = arith.divf %587, %588 : vector<8x32xf32>
    %590 = vector.extract_strided_slice %583 {offsets = [0, 32], sizes = [8, 32], strides = [1, 1]} : vector<8x128xf32> to vector<8x32xf32>
    %591 = arith.negf %590 : vector<8x32xf32>
    %592 = math.exp %591 : vector<8x32xf32>
    %cst_188 = arith.constant 1.000000e+00 : f32
    %593 = vector.broadcast %cst_188 : f32 to vector<8x32xf32>
    %594 = arith.addf %593, %592 : vector<8x32xf32>
    %595 = arith.divf %593, %594 : vector<8x32xf32>
    %596 = vector.extract_strided_slice %583 {offsets = [0, 64], sizes = [8, 32], strides = [1, 1]} : vector<8x128xf32> to vector<8x32xf32>
    %597 = math.tanh %596 : vector<8x32xf32>
    %598 = vector.extract_strided_slice %583 {offsets = [0, 96], sizes = [8, 32], strides = [1, 1]} : vector<8x128xf32> to vector<8x32xf32>
    %599 = arith.negf %598 : vector<8x32xf32>
    %600 = math.exp %599 : vector<8x32xf32>
    %cst_189 = arith.constant 1.000000e+00 : f32
    %601 = vector.broadcast %cst_189 : f32 to vector<8x32xf32>
    %602 = arith.addf %601, %600 : vector<8x32xf32>
    %603 = arith.divf %601, %602 : vector<8x32xf32>
    %604 = arith.mulf %595, %569 : vector<8x32xf32>
    %605 = arith.mulf %589, %597 : vector<8x32xf32>
    %606 = arith.addf %604, %605 : vector<8x32xf32>
    %607 = math.tanh %606 : vector<8x32xf32>
    %608 = arith.mulf %603, %607 : vector<8x32xf32>
    %609 = arith.truncf %608 : vector<8x32xf32> to vector<8x32xbf16>
    %610 = arith.index_cast %c7_i32_181 : i32 to index
    %c0_190 = arith.constant 0 : index
    %c0_191 = arith.constant 0 : index
    %611 = vector.load %arg12[%610, %c0_190, %c0_191] : memref<8x8x32xbf16, #tpu.memory_space<vmem>>, vector<1x8x32xbf16>
    %612 = vector.shape_cast %611 : vector<1x8x32xbf16> to vector<8x32xbf16>
    %613 = vector.shape_cast %609 : vector<8x32xbf16> to vector<1x8x32xbf16>
    tpu.vector_store %arg12[%610, %c0_190, %c0_191], %613 {strides = array<i32>} : memref<8x8x32xbf16, #tpu.memory_space<vmem>>, vector<1x8x32xbf16>,
    %c8_i32_192 = arith.constant 8 : i32
    %c0_193 = arith.constant 0 : index
    %c0_194 = arith.constant 0 : index
    %c0_195 = arith.constant 0 : index
    %614 = vector.load %arg12[%c0_193, %c0_194, %c0_195] : memref<8x8x32xbf16, #tpu.memory_space<vmem>>, vector<8x8x32xbf16>
    %615 = vector.shape_cast %614 : vector<8x8x32xbf16> to vector<64x32xbf16>
    %c0_196 = arith.constant 0 : index
    %c0_197 = arith.constant 0 : index
    %616 = vector.load %arg8[%c0_196, %c0_197] : memref<32x128xbf16, #tpu.memory_space<vmem>>, vector<32x128xbf16>
    %cst_198 = arith.constant dense<0.000000e+00> : vector<64x128xf32>
    %617 = tpu.matmul %615, %616, %cst_198 {dimension_numbers = #tpu.dot_dimension_numbers<[1], [0], [0], [1], [0, 0, 1, 1], [], []>} : vector<64x32xbf16>, vector<32x128xbf16>, vector<64x128xf32> -> vector<64x128xf32>
    %c0_199 = arith.constant 0 : index
    %c0_200 = arith.constant 0 : index
    %618 = vector.load %arg9[%c0_199, %c0_200] : memref<1x128xf32, #tpu.memory_space<vmem>>, vector<1x128xf32>
    %619 = vector.broadcast %618 : vector<1x128xf32> to vector<64x128xf32>
    %620 = arith.addf %617, %619 : vector<64x128xf32>
    %621 = vector.shape_cast %620 : vector<64x128xf32> to vector<8x8x128xf32>
    %cst_201 = arith.constant dense<0xFF800000> : vector<8x128xf32>
    %622 = vector.multi_reduction <maximumf>, %621, %cst_201 [0] : vector<8x8x128xf32> to vector<8x128xf32>
    %623 = vector.shape_cast %622 : vector<8x128xf32> to vector<1x8x128xf32>
    %624 = vector.broadcast %623 : vector<1x8x128xf32> to vector<8x8x128xf32>
    %625 = arith.subf %621, %624 : vector<8x8x128xf32>
    %626 = math.exp %625 : vector<8x8x128xf32>
    %cst_202 = arith.constant dense<0.000000e+00> : vector<8x128xf32>
    %627 = vector.multi_reduction <add>, %626, %cst_202 [0] : vector<8x8x128xf32> to vector<8x128xf32>
    %628 = vector.shape_cast %627 : vector<8x128xf32> to vector<1x8x128xf32>
    %629 = tpu.reciprocal %628 {approx = true} : vector<1x8x128xf32> -> vector<1x8x128xf32>
    %630 = vector.broadcast %629 : vector<1x8x128xf32> to vector<8x8x128xf32>
    %631 = arith.mulf %626, %630 : vector<8x8x128xf32>
    %c0_203 = arith.constant 0 : index
    %c0_204 = arith.constant 0 : index
    %c0_205 = arith.constant 0 : index
    %632 = vector.load %arg10[%c0_203, %c0_204, %c0_205] : memref<8x8x128xf32, #tpu.memory_space<vmem>>, vector<8x8x128xf32>
    tpu.vector_store %arg10[%c0_203, %c0_204, %c0_205], %631 {strides = array<i32>} : memref<8x8x128xf32, #tpu.memory_space<vmem>>, vector<8x8x128xf32>,
    return
  }
  func.func @transform_0(%arg0: i32) -> (i32, i32, i32) {
    %c0_i32 = arith.constant 0 : i32
    %c0_i32_0 = arith.constant 0 : i32
    %c0_i32_1 = arith.constant 0 : i32
    return %c0_i32, %arg0, %c0_i32_0 : i32, i32, i32
  }
  func.func @transform_1(%arg0: i32) -> (i32, i32) {
    %c0_i32 = arith.constant 0 : i32
    %c0_i32_0 = arith.constant 0 : i32
    %c0_i32_1 = arith.constant 0 : i32
    return %c0_i32, %c0_i32_0 : i32, i32
  }
  func.func @transform_2(%arg0: i32) -> (i32, i32) {
    %c0_i32 = arith.constant 0 : i32
    %c0_i32_0 = arith.constant 0 : i32
    %c0_i32_1 = arith.constant 0 : i32
    return %c0_i32, %c0_i32_0 : i32, i32
  }
  func.func @transform_3(%arg0: i32) -> (i32, i32) {
    %c0_i32 = arith.constant 0 : i32
    %c0_i32_0 = arith.constant 0 : i32
    %c0_i32_1 = arith.constant 0 : i32
    return %c0_i32, %c0_i32_0 : i32, i32
  }
  func.func @transform_4(%arg0: i32) -> (i32, i32) {
    %c0_i32 = arith.constant 0 : i32
    %c0_i32_0 = arith.constant 0 : i32
    %c0_i32_1 = arith.constant 0 : i32
    return %c0_i32, %c0_i32_0 : i32, i32
  }
  func.func @transform_5(%arg0: i32) -> (i32, i32) {
    %c0_i32 = arith.constant 0 : i32
    %c0_i32_0 = arith.constant 0 : i32
    %c0_i32_1 = arith.constant 0 : i32
    return %c0_i32, %c0_i32_0 : i32, i32
  }
  func.func @transform_6(%arg0: i32) -> (i32, i32) {
    %c0_i32 = arith.constant 0 : i32
    %c0_i32_0 = arith.constant 0 : i32
    %c0_i32_1 = arith.constant 0 : i32
    return %c0_i32, %c0_i32_0 : i32, i32
  }
  func.func @transform_7(%arg0: i32) -> (i32, i32) {
    %c0_i32 = arith.constant 0 : i32
    %c0_i32_0 = arith.constant 0 : i32
    %c0_i32_1 = arith.constant 0 : i32
    return %c0_i32, %c0_i32_0 : i32, i32
  }
  func.func @transform_8(%arg0: i32) -> (i32, i32) {
    %c0_i32 = arith.constant 0 : i32
    %c0_i32_0 = arith.constant 0 : i32
    %c0_i32_1 = arith.constant 0 : i32
    return %c0_i32, %c0_i32_0 : i32, i32
  }
  func.func @transform_9(%arg0: i32) -> (i32, i32, i32) {
    %c0_i32 = arith.constant 0 : i32
    %c0_i32_0 = arith.constant 0 : i32
    %c0_i32_1 = arith.constant 0 : i32
    return %c0_i32, %arg0, %c0_i32_0 : i32, i32, i32
  }
}

</mosaic_0001>

<llo_original>
// kernel: lstm_classifier_forward.1
$region0: #{lstm_classifier_forward.1}
  #allocation0 [shape = 'u32[]', space=smem, size = 0x4, offset = 0x4, fixed_abs, tag = 'smem constant byte address 0x4 - core index']
  #allocation1 [shape = 'u32[72,128]{1,0:T(1,128)}', space=vmem, size = 0x9000, scoped, tag = 'internal scratch']
  #allocation2 [shape = 'f32[8,8,128]{2,1,0:T(8,128)}', space=vmem, size = 0x8000, scoped, tag = 'scratch operand']
  #allocation3 [shape = 'bf16[8,8,32]{2,1,0:T(8,128)(2,1)}', space=vmem, size = 0x4000, scoped, tag = 'scratch operand']
  %s0 = inlined_call_operand.vmem [shape: bf16[8,8,16], index: 0, kind: input, shape index: {}]
  %s1 = inlined_call_operand.hbm [shape: bf16[16,128], index: 1, kind: input, shape index: {}]
  %s2 = inlined_call_operand.vmem [shape: bf16[32,128], index: 2, kind: input, shape index: {}]
  %s3 = inlined_call_operand.vmem [shape: f32[1,128], index: 3, kind: input, shape index: {}]
  %s4 = inlined_call_operand.vmem [shape: bf16[32,128], index: 4, kind: input, shape index: {}]
  %s5 = inlined_call_operand.vmem [shape: bf16[32,128], index: 5, kind: input, shape index: {}]
  %s6 = inlined_call_operand.vmem [shape: f32[1,128], index: 6, kind: input, shape index: {}]
  %s7 = inlined_call_operand.vmem [shape: bf16[32,128], index: 7, kind: input, shape index: {}]
  %s8 = inlined_call_operand.vmem [shape: f32[1,128], index: 8, kind: input, shape index: {}]
  %s9 = inlined_call_operand.vmem [shape: f32[8,8,128], index: 9, kind: output, shape index: {}]
  %s10 = sld [smem:[#allocation0]]
  $region50: #{lstm_classifier_forward.1} parent=0
    _
  %s12 = ssub.s32 1, %s10
  %s13 = scalar_select 0, %s12, %s10
  $region1: #{lstm_classifier_forward.1} parent=0
    #allocation4 [shape = 'u8[4096]{0}', space=vmem, size = 0x1000, scoped, tag = 'input window, operand 1, single buffered']
    #allocation5 [shape = 's32[1]{0}', space=sflag, size = 0x4, scoped, tag = 'scoped memory for lstm_classifier_forward.1']
    %14 = vsyncpa [#allocation5], 0
    // Predicated region
    $region2: #{lstm_classifier_forward.1} parent=1 // pred_check
      _
    $region3: #{lstm_classifier_forward.1} parent=1 // pred_check_branch
      %16 = sbr.rel (0) target = $region5
    $region4: #{lstm_classifier_forward.1} parent=1 // pred_region
      _
    $region5: #{lstm_classifier_forward.1} parent=1 // pred_fallthru
      _
    // Predicated region
    $region6: #{lstm_classifier_forward.1} parent=1 // pred_check
      _
    $region7: #{lstm_classifier_forward.1} parent=1 // pred_check_branch
      %18 = sbr.rel (0) target = $region9
    $region8: #{lstm_classifier_forward.1} parent=1 // pred_region
      %20 = vsyncadd [#allocation5], 0
      %s21 = sshll.u32 %s1, 4
      %s22 = int_to_ptr.hbm [resolvable:$true] %s21
      %s23 = sshll.u32 [#allocation4], 4
      %s24 = int_to_ptr.vmem [resolvable:$true] %s23
      %29 = dma.hbm_to_vmem [thread:$0]  %s22, 128, %s24, [#allocation5], 64, 64, 4
    $region9: #{lstm_classifier_forward.1} parent=1 // pred_fallthru
      _
    // Predicated region
    $region10: #{lstm_classifier_forward.1} parent=1 // pred_check
      _
    $region11: #{lstm_classifier_forward.1} parent=1 // pred_check_branch
      %31 = sbr.rel (0) target = $region13
    $region12: #{lstm_classifier_forward.1} parent=1 // pred_region
      _
    $region13: #{lstm_classifier_forward.1} parent=1 // pred_fallthru
      _
    // Predicated region
    $region14: #{lstm_classifier_forward.1} parent=1 // pred_check
      _
    $region15: #{lstm_classifier_forward.1} parent=1 // pred_check_branch
      %33 = sbr.rel (0) target = $region17
    $region16: #{lstm_classifier_forward.1} parent=1 // pred_region
      _
    $region17: #{lstm_classifier_forward.1} parent=1 // pred_fallthru
      _
    // Predicated region
    $region18: #{lstm_classifier_forward.1} parent=1 // pred_check
      _
    $region19: #{lstm_classifier_forward.1} parent=1 // pred_check_branch
      %35 = sbr.rel (0) target = $region21
    $region20: #{lstm_classifier_forward.1} parent=1 // pred_region
      _
    $region21: #{lstm_classifier_forward.1} parent=1 // pred_fallthru
      _
    // Predicated region
    $region22: #{lstm_classifier_forward.1} parent=1 // pred_check
      _
    $region23: #{lstm_classifier_forward.1} parent=1 // pred_check_branch
      %37 = sbr.rel (0) target = $region25
    $region24: #{lstm_classifier_forward.1} parent=1 // pred_region
      _
    $region25: #{lstm_classifier_forward.1} parent=1 // pred_fallthru
      _
    // Predicated region
    $region26: #{lstm_classifier_forward.1} parent=1 // pred_check
      _
    $region27: #{lstm_classifier_forward.1} parent=1 // pred_check_branch
      %39 = sbr.rel (0) target = $region29
    $region28: #{lstm_classifier_forward.1} parent=1 // pred_region
      _
    $region29: #{lstm_classifier_forward.1} parent=1 // pred_fallthru
      _
    // Predicated region
    $region30: #{lstm_classifier_forward.1} parent=1 // pred_check
      _
    $region31: #{lstm_classifier_forward.1} parent=1 // pred_check_branch
      %41 = sbr.rel (0) target = $region33
    $region32: #{lstm_classifier_forward.1} parent=1 // pred_region
      _
    $region33: #{lstm_classifier_forward.1} parent=1 // pred_fallthru
      _
    // Predicated region
    $region34: #{lstm_classifier_forward.1} parent=1 // pred_check
      _
    $region35: #{lstm_classifier_forward.1} parent=1 // pred_check_branch
      %43 = sbr.rel (0) target = $region37
    $region36: #{lstm_classifier_forward.1} parent=1 // pred_region
      _
    $region37: #{lstm_classifier_forward.1} parent=1 // pred_fallthru
      _
    // Predicated region
    $region38: #{lstm_classifier_forward.1} parent=1 // pred_check
      _
    $region39: #{lstm_classifier_forward.1} parent=1 // pred_check_branch
      %45 = sbr.rel (0) target = $region41
    $region40: #{lstm_classifier_forward.1} parent=1 // pred_region
      %47 = dma.done [#allocation5], 128
    $region41: #{lstm_classifier_forward.1} parent=1 // pred_fallthru
      _
    %v49 = vld [vmem:[%s0] sm:$0xf]
    %v50 = vld [vmem:[%s0 + $0x4] sm:$0xf]
    %v51 = vld [vmem:[%s0 + $0x8] sm:$0xf]
    %v52 = vld [vmem:[%s0 + $0xc] sm:$0xf]
    %v53 = vld [vmem:[%s0 + $0x10] sm:$0xf]
    %v54 = vld [vmem:[%s0 + $0x14] sm:$0xf]
    %v55 = vld [vmem:[%s0 + $0x18] sm:$0xf]
    %v56 = vld [vmem:[%s0 + $0x1c] sm:$0xf]
    %v57 = vld [vmem:[#allocation4] sm:$0xf]
    %v58 = vld [vmem:[#allocation4 + $0x4] sm:$0xf]
    %v59 = vld [vmem:[%s3] sm:$0x1]
    %v61 = vperm.slane %v59, 0
    %v71 = vunpack.c.l.b16 %v49
    %v72 = vunpack.c.l.b16 %v50
    %v73 = vunpack.c.l.b16 %v51
    %v74 = vunpack.c.l.b16 %v52
    %v75 = vunpack.c.l.b16 %v53
    %v76 = vunpack.c.l.b16 %v54
    %v77 = vunpack.c.l.b16 %v55
    %v78 = vunpack.c.l.b16 %v56
    %v79 = vpack.c.b16 %v72, %v71
    %v80 = vpack.c.b16 %v74, %v73
    %v81 = vpack.c.b16 %v76, %v75
    %v82 = vpack.c.b16 %v78, %v77
    %v85 = vunpack.c.l.b16 %v57
    %v86 = vunpack.c.l.b16 %v58
    %v87 = vpack.c.b16 %v86, %v85
    %vm89 = vcmask 130048
    %v91 = vsel %vm89, %v79, 0
    %v94 = vsel %vm89, %v80, 0
    %v97 = vsel %vm89, %v81, 0
    %v100 = vsel %vm89, %v82, 0
    %102 = vmatpush.bf16.msra.mxu0 0
    %103 = vmatpush.bf16.msra.mxu0 0
    %104 = vmatpush.bf16.msra.mxu0 0
    %105 = vmatpush.bf16.msra.mxu0 0
    %106 = vmatpush.bf16.msra.mxu0 0
    %107 = vmatpush.bf16.msra.mxu0 0
    %108 = vmatpush.bf16.msra.mxu0 0
    %109 = vmatpush.bf16.msra.mxu0 %v87
    %110 = vmatmul.bf16.gmra.mxu0 %v91
    %v111 = vpop.f32.mrf.mxu0
    %v112 = vadd.f32 %v61, %v111
    %v113 = vpop.f32.mrf.mxu0
    %v114 = vadd.f32 %v61, %v113
    %115 = vmatmul.bf16.gmra.mxu0 %v94
    %v116 = vpop.f32.mrf.mxu0
    %v117 = vadd.f32 %v61, %v116
    %v118 = vpop.f32.mrf.mxu0
    %v119 = vadd.f32 %v61, %v118
    %120 = vmatmul.bf16.gmra.mxu0 %v97
    %v121 = vpop.f32.mrf.mxu0
    %v122 = vadd.f32 %v61, %v121
    %v123 = vpop.f32.mrf.mxu0
    %v124 = vadd.f32 %v61, %v123
    %125 = vmatmul.bf16.gmra.mxu0 %v100
    %v126 = vpop.f32.mrf.mxu0
    %v127 = vadd.f32 %v61, %v126
    %v128 = vpop.f32.mrf.mxu0
    %v129 = vadd.f32 %v61, %v128
    %130 = vdwg.mxu0
    %131 = vst [vmem:[#allocation2] sm:$0xff] %v112
    %132 = vst [vmem:[#allocation2 + $0x8] sm:$0xff] %v114
    %133 = vst [vmem:[#allocation2 + $0x10] sm:$0xff] %v117
    %134 = vst [vmem:[#allocation2 + $0x18] sm:$0xff] %v119
    %135 = vst [vmem:[#allocation2 + $0x20] sm:$0xff] %v122
    %136 = vst [vmem:[#allocation2 + $0x28] sm:$0xff] %v124
    %137 = vst [vmem:[#allocation2 + $0x30] sm:$0xff] %v127
    %138 = vst [vmem:[#allocation2 + $0x38] sm:$0xff] %v129
    %v139 = vld [vmem:[#allocation2] sm:$0xff]
    %v140 = vld [vmem:[%s2] sm:$0xf]
    %v141 = vld [vmem:[%s2 + $0x4] sm:$0xf]
    %v142 = vld [vmem:[%s2 + $0x8] sm:$0xf]
    %v143 = vld [vmem:[%s2 + $0xc] sm:$0xf]
    %v148 = vunpack.c.l.b16 %v140
    %v149 = vunpack.c.l.b16 %v141
    %v150 = vunpack.c.l.b16 %v142
    %v151 = vunpack.c.l.b16 %v143
    %v152 = vpack.c.b16 %v149, %v148
    %v153 = vpack.c.b16 %v151, %v150
    %vm156 = vcmask 261120
    %v158 = vsel %vm156, 0, 0
    %160 = vmatpush.bf16.msra.mxu0 0
    %161 = vmatpush.bf16.msra.mxu0 0
    %162 = vmatpush.bf16.msra.mxu0 0
    %163 = vmatpush.bf16.msra.mxu0 0
    %164 = vmatpush.bf16.msra.mxu0 0
    %165 = vmatpush.bf16.msra.mxu0 0
    %166 = vmatpush.bf16.msra.mxu0 %v153
    %167 = vmatpush.bf16.msra.mxu0 %v152
    %168 = vmatmul.bf16.gmra.mxu0 %v158
    %v169 = vpop.f32.mrf.mxu0
    %v170 = vadd.f32 0.0, %v169
    %v171 = vpop.f32.mrf.mxu0
    %172 = vdwg.mxu0
    %v173 = vadd.f32 %v139, %v170
    %v174 = vxor.u32 %v173, 2147483648
    %v175 = vmul.f32 %v174, 1.442695
    %v176 = vpow.pop %v175
    %v177 = vadd.f32 %v176, 1.0
    %v178 = vrcp.pop %v177
    %v179 = vmul.f32 %v177, %v178
    %v180 = vsub.f32 1.0, %v179
    %v181 = vmul.f32 %v178, %v180
    %v182 = vadd.f32 %v178, %v181
    %vm183 = vweird.f32 %v177
    %vm184 = vweird.f32 %v178
    %vm185 = vmor %vm183, %vm184
    %v186 = vsel %vm185, %v178, %v182
    %v187 = vand.u32 2147483647, %v177
    %vm188 = vcmp.eq.f32.partialorder %v187, 8.507059e+37
    %v189 = vand.u32 %v177, 2147483648
    %v190 = vor.u32 1.1754944e-38, %v189
    %v191 = vsel %vm188, %v190, %v186
    %v192 = vmul.f32 1.0, %v191
    %v193 = vtanh.pop %v173
    %v194 = vmul.f32 %v192, 0.0
    %196 = vrot.lane.b32.xlu0 %v193, 64
    %v197 = vpop.permute.xlu0 %196
    %v199 = vmul.f32 %v192, %v197
    %201 = vrot.lane.b32.xlu0 %v199, 32
    %v202 = vpop.permute.xlu0 %201
    %v204 = vadd.f32 %v194, %v202
    %v205 = vtanh.pop %v204
    %207 = vrot.lane.b32.xlu0 %v205, 64
    %v208 = vpop.permute.xlu0 %207
    %v210 = vmul.f32 %v192, %v208
    %v211 = vpack.c.bf16 %v210, %v210
    %213 = vrot.lane.b32.xlu0 %v211, 32
    %v214 = vpop.permute.xlu0 %213
    %vm216 = vcmask 257024
    %217 = vst.msk [vmem:[#allocation3] sm:$0xf] %vm216, %v214
    %s218 = scalar_lea.vmem [#allocation2], 8
    %v219 = vld [vmem:[%s218] sm:$0xff]
    %v220 = vld [vmem:[%s2] sm:$0xf]
    %v221 = vld [vmem:[%s2 + $0x4] sm:$0xf]
    %v222 = vld [vmem:[%s2 + $0x8] sm:$0xf]
    %v223 = vld [vmem:[%s2 + $0xc] sm:$0xf]
    %v224 = vunpack.c.l.b16 %v211
    %v225 = vpack.c.b16 %v224, %v224
    %226 = vrot.lane.b32.xlu0 %v225, 32
    %v227 = vpop.permute.xlu0 %226
    %v232 = vunpack.c.l.b16 %v220
    %v233 = vunpack.c.l.b16 %v221
    %v234 = vunpack.c.l.b16 %v222
    %v235 = vunpack.c.l.b16 %v223
    %v236 = vpack.c.b16 %v233, %v232
    %v237 = vpack.c.b16 %v235, %v234
    %v241 = vsel %vm156, %v227, 0
    %243 = vmatpush.bf16.msra.mxu0 0
    %244 = vmatpush.bf16.msra.mxu0 0
    %245 = vmatpush.bf16.msra.mxu0 0
    %246 = vmatpush.bf16.msra.mxu0 0
    %247 = vmatpush.bf16.msra.mxu0 0
    %248 = vmatpush.bf16.msra.mxu0 0
    %249 = vmatpush.bf16.msra.mxu0 %v237
    %250 = vmatpush.bf16.msra.mxu0 %v236
    %251 = vmatmul.bf16.gmra.mxu0 %v241
    %v252 = vpop.f32.mrf.mxu0
    %v253 = vadd.f32 0.0, %v252
    %v254 = vpop.f32.mrf.mxu0
    %255 = vdwg.mxu0
    %v256 = vadd.f32 %v219, %v253
    %v257 = vxor.u32 %v256, 2147483648
    %v258 = vmul.f32 %v257, 1.442695
    %v259 = vpow.pop %v258
    %v260 = vadd.f32 %v259, 1.0
    %v261 = vrcp.pop %v260
    %v262 = vmul.f32 %v260, %v261
    %v263 = vsub.f32 1.0, %v262
    %v264 = vmul.f32 %v261, %v263
    %v265 = vadd.f32 %v261, %v264
    %vm266 = vweird.f32 %v260
    %vm267 = vweird.f32 %v261
    %vm268 = vmor %vm266, %vm267
    %v269 = vsel %vm268, %v261, %v265
    %v270 = vand.u32 2147483647, %v260
    %vm271 = vcmp.eq.f32.partialorder %v270, 8.507059e+37
    %v272 = vand.u32 %v260, 2147483648
    %v273 = vor.u32 1.1754944e-38, %v272
    %v274 = vsel %vm271, %v273, %v269
    %v275 = vmul.f32 1.0, %v274
    %v276 = vtanh.pop %v256
    %v277 = vmul.f32 %v275, %v204
    %279 = vrot.lane.b32.xlu0 %v276, 64
    %v280 = vpop.permute.xlu0 %279
    %v282 = vmul.f32 %v275, %v280
    %284 = vrot.lane.b32.xlu0 %v282, 32
    %v285 = vpop.permute.xlu0 %284
    %v287 = vadd.f32 %v277, %v285
    %v288 = vtanh.pop %v287
    %290 = vrot.lane.b32.xlu0 %v288, 64
    %v291 = vpop.permute.xlu0 %290
    %v293 = vmul.f32 %v275, %v291
    %v294 = vpack.c.bf16 %v293, %v293
    %296 = vrot.lane.b32.xlu0 %v294, 32
    %v297 = vpop.permute.xlu0 %296
    %s299 = scalar_lea.vmem [#allocation3], 4
    %300 = vst.msk [vmem:[%s299] sm:$0xf] %vm216, %v297
    %s301 = scalar_lea.vmem [#allocation2], 16
    %v302 = vld [vmem:[%s301] sm:$0xff]
    %v303 = vld [vmem:[%s2] sm:$0xf]
    %v304 = vld [vmem:[%s2 + $0x4] sm:$0xf]
    %v305 = vld [vmem:[%s2 + $0x8] sm:$0xf]
    %v306 = vld [vmem:[%s2 + $0xc] sm:$0xf]
    %v307 = vunpack.c.l.b16 %v294
    %v308 = vpack.c.b16 %v307, %v307
    %309 = vrot.lane.b32.xlu0 %v308, 32
    %v310 = vpop.permute.xlu0 %309
    %v315 = vunpack.c.l.b16 %v303
    %v316 = vunpack.c.l.b16 %v304
    %v317 = vunpack.c.l.b16 %v305
    %v318 = vunpack.c.l.b16 %v306
    %v319 = vpack.c.b16 %v316, %v315
    %v320 = vpack.c.b16 %v318, %v317
    %v324 = vsel %vm156, %v310, 0
    %326 = vmatpush.bf16.msra.mxu0 0
    %327 = vmatpush.bf16.msra.mxu0 0
    %328 = vmatpush.bf16.msra.mxu0 0
    %329 = vmatpush.bf16.msra.mxu0 0
    %330 = vmatpush.bf16.msra.mxu0 0
    %331 = vmatpush.bf16.msra.mxu0 0
    %332 = vmatpush.bf16.msra.mxu0 %v320
    %333 = vmatpush.bf16.msra.mxu0 %v319
    %334 = vmatmul.bf16.gmra.mxu0 %v324
    %v335 = vpop.f32.mrf.mxu0
    %v336 = vadd.f32 0.0, %v335
    %v337 = vpop.f32.mrf.mxu0
    %338 = vdwg.mxu0
    %v339 = vadd.f32 %v302, %v336
    %v340 = vxor.u32 %v339, 2147483648
    %v341 = vmul.f32 %v340, 1.442695
    %v342 = vpow.pop %v341
    %v343 = vadd.f32 %v342, 1.0
    %v344 = vrcp.pop %v343
    %v345 = vmul.f32 %v343, %v344
    %v346 = vsub.f32 1.0, %v345
    %v347 = vmul.f32 %v344, %v346
    %v348 = vadd.f32 %v344, %v347
    %vm349 = vweird.f32 %v343
    %vm350 = vweird.f32 %v344
    %vm351 = vmor %vm349, %vm350
    %v352 = vsel %vm351, %v344, %v348
    %v353 = vand.u32 2147483647, %v343
    %vm354 = vcmp.eq.f32.partialorder %v353, 8.507059e+37
    %v355 = vand.u32 %v343, 2147483648
    %v356 = vor.u32 1.1754944e-38, %v355
    %v357 = vsel %vm354, %v356, %v352
    %v358 = vmul.f32 1.0, %v357
    %v359 = vtanh.pop %v339
    %v360 = vmul.f32 %v358, %v287
    %362 = vrot.lane.b32.xlu0 %v359, 64
    %v363 = vpop.permute.xlu0 %362
    %v365 = vmul.f32 %v358, %v363
    %367 = vrot.lane.b32.xlu0 %v365, 32
    %v368 = vpop.permute.xlu0 %367
    %v370 = vadd.f32 %v360, %v368
    %v371 = vtanh.pop %v370
    %373 = vrot.lane.b32.xlu0 %v371, 64
    %v374 = vpop.permute.xlu0 %373
    %v376 = vmul.f32 %v358, %v374
    %v377 = vpack.c.bf16 %v376, %v376
    %379 = vrot.lane.b32.xlu0 %v377, 32
    %v380 = vpop.permute.xlu0 %379
    %s382 = scalar_lea.vmem [#allocation3], 8
    %383 = vst.msk [vmem:[%s382] sm:$0xf] %vm216, %v380
    %s384 = scalar_lea.vmem [#allocation2], 24
    %v385 = vld [vmem:[%s384] sm:$0xff]
    %v386 = vld [vmem:[%s2] sm:$0xf]
    %v387 = vld [vmem:[%s2 + $0x4] sm:$0xf]
    %v388 = vld [vmem:[%s2 + $0x8] sm:$0xf]
    %v389 = vld [vmem:[%s2 + $0xc] sm:$0xf]
    %v390 = vunpack.c.l.b16 %v377
    %v391 = vpack.c.b16 %v390, %v390
    %392 = vrot.lane.b32.xlu0 %v391, 32
    %v393 = vpop.permute.xlu0 %392
    %v398 = vunpack.c.l.b16 %v386
    %v399 = vunpack.c.l.b16 %v387
    %v400 = vunpack.c.l.b16 %v388
    %v401 = vunpack.c.l.b16 %v389
    %v402 = vpack.c.b16 %v399, %v398
    %v403 = vpack.c.b16 %v401, %v400
    %v407 = vsel %vm156, %v393, 0
    %409 = vmatpush.bf16.msra.mxu0 0
    %410 = vmatpush.bf16.msra.mxu0 0
    %411 = vmatpush.bf16.msra.mxu0 0
    %412 = vmatpush.bf16.msra.mxu0 0
    %413 = vmatpush.bf16.msra.mxu0 0
    %414 = vmatpush.bf16.msra.mxu0 0
    %415 = vmatpush.bf16.msra.mxu0 %v403
    %416 = vmatpush.bf16.msra.mxu0 %v402
    %417 = vmatmul.bf16.gmra.mxu0 %v407
    %v418 = vpop.f32.mrf.mxu0
    %v419 = vadd.f32 0.0, %v418
    %v420 = vpop.f32.mrf.mxu0
    %421 = vdwg.mxu0
    %v422 = vadd.f32 %v385, %v419
    %v423 = vxor.u32 %v422, 2147483648
    %v424 = vmul.f32 %v423, 1.442695
    %v425 = vpow.pop %v424
    %v426 = vadd.f32 %v425, 1.0
    %v427 = vrcp.pop %v426
    %v428 = vmul.f32 %v426, %v427
    %v429 = vsub.f32 1.0, %v428
    %v430 = vmul.f32 %v427, %v429
    %v431 = vadd.f32 %v427, %v430
    %vm432 = vweird.f32 %v426
    %vm433 = vweird.f32 %v427
    %vm434 = vmor %vm432, %vm433
    %v435 = vsel %vm434, %v427, %v431
    %v436 = vand.u32 2147483647, %v426
    %vm437 = vcmp.eq.f32.partialorder %v436, 8.507059e+37
    %v438 = vand.u32 %v426, 2147483648
    %v439 = vor.u32 1.1754944e-38, %v438
    %v440 = vsel %vm437, %v439, %v435
    %v441 = vmul.f32 1.0, %v440
    %v442 = vtanh.pop %v422
    %v443 = vmul.f32 %v441, %v370
    %445 = vrot.lane.b32.xlu0 %v442, 64
    %v446 = vpop.permute.xlu0 %445
    %v448 = vmul.f32 %v441, %v446
    %450 = vrot.lane.b32.xlu0 %v448, 32
    %v451 = vpop.permute.xlu0 %450
    %v453 = vadd.f32 %v443, %v451
    %v454 = vtanh.pop %v453
    %456 = vrot.lane.b32.xlu0 %v454, 64
    %v457 = vpop.permute.xlu0 %456
    %v459 = vmul.f32 %v441, %v457
    %v460 = vpack.c.bf16 %v459, %v459
    %462 = vrot.lane.b32.xlu0 %v460, 32
    %v463 = vpop.permute.xlu0 %462
    %s465 = scalar_lea.vmem [#allocation3], 12
    %466 = vst.msk [vmem:[%s465] sm:$0xf] %vm216, %v463
    %s467 = scalar_lea.vmem [#allocation2], 32
    %v468 = vld [vmem:[%s467] sm:$0xff]
    %v469 = vld [vmem:[%s2] sm:$0xf]
    %v470 = vld [vmem:[%s2 + $0x4] sm:$0xf]
    %v471 = vld [vmem:[%s2 + $0x8] sm:$0xf]
    %v472 = vld [vmem:[%s2 + $0xc] sm:$0xf]
    %v473 = vunpack.c.l.b16 %v460
    %v474 = vpack.c.b16 %v473, %v473
    %475 = vrot.lane.b32.xlu0 %v474, 32
    %v476 = vpop.permute.xlu0 %475
    %v481 = vunpack.c.l.b16 %v469
    %v482 = vunpack.c.l.b16 %v470
    %v483 = vunpack.c.l.b16 %v471
    %v484 = vunpack.c.l.b16 %v472
    %v485 = vpack.c.b16 %v482, %v481
    %v486 = vpack.c.b16 %v484, %v483
    %v490 = vsel %vm156, %v476, 0
    %492 = vmatpush.bf16.msra.mxu0 0
    %493 = vmatpush.bf16.msra.mxu0 0
    %494 = vmatpush.bf16.msra.mxu0 0
    %495 = vmatpush.bf16.msra.mxu0 0
    %496 = vmatpush.bf16.msra.mxu0 0
    %497 = vmatpush.bf16.msra.mxu0 0
    %498 = vmatpush.bf16.msra.mxu0 %v486
    %499 = vmatpush.bf16.msra.mxu0 %v485
    %500 = vmatmul.bf16.gmra.mxu0 %v490
    %v501 = vpop.f32.mrf.mxu0
    %v502 = vadd.f32 0.0, %v501
    %v503 = vpop.f32.mrf.mxu0
    %504 = vdwg.mxu0
    %v505 = vadd.f32 %v468, %v502
    %v506 = vxor.u32 %v505, 2147483648
    %v507 = vmul.f32 %v506, 1.442695
    %v508 = vpow.pop %v507
    %v509 = vadd.f32 %v508, 1.0
    %v510 = vrcp.pop %v509
    %v511 = vmul.f32 %v509, %v510
    %v512 = vsub.f32 1.0, %v511
    %v513 = vmul.f32 %v510, %v512
    %v514 = vadd.f32 %v510, %v513
    %vm515 = vweird.f32 %v509
    %vm516 = vweird.f32 %v510
    %vm517 = vmor %vm515, %vm516
    %v518 = vsel %vm517, %v510, %v514
    %v519 = vand.u32 2147483647, %v509
    %vm520 = vcmp.eq.f32.partialorder %v519, 8.507059e+37
    %v521 = vand.u32 %v509, 2147483648
    %v522 = vor.u32 1.1754944e-38, %v521
    %v523 = vsel %vm520, %v522, %v518
    %v524 = vmul.f32 1.0, %v523
    %v525 = vtanh.pop %v505
    %v526 = vmul.f32 %v524, %v453
    %528 = vrot.lane.b32.xlu0 %v525, 64
    %v529 = vpop.permute.xlu0 %528
    %v531 = vmul.f32 %v524, %v529
    %533 = vrot.lane.b32.xlu0 %v531, 32
    %v534 = vpop.permute.xlu0 %533
    %v536 = vadd.f32 %v526, %v534
    %v537 = vtanh.pop %v536
    %539 = vrot.lane.b32.xlu0 %v537, 64
    %v540 = vpop.permute.xlu0 %539
    %v542 = vmul.f32 %v524, %v540
    %v543 = vpack.c.bf16 %v542, %v542
    %545 = vrot.lane.b32.xlu0 %v543, 32
    %v546 = vpop.permute.xlu0 %545
    %s548 = scalar_lea.vmem [#allocation3], 16
    %549 = vst.msk [vmem:[%s548] sm:$0xf] %vm216, %v546
    %s550 = scalar_lea.vmem [#allocation2], 40
    %v551 = vld [vmem:[%s550] sm:$0xff]
    %v552 = vld [vmem:[%s2] sm:$0xf]
    %v553 = vld [vmem:[%s2 + $0x4] sm:$0xf]
    %v554 = vld [vmem:[%s2 + $0x8] sm:$0xf]
    %v555 = vld [vmem:[%s2 + $0xc] sm:$0xf]
    %v556 = vunpack.c.l.b16 %v543
    %v557 = vpack.c.b16 %v556, %v556
    %558 = vrot.lane.b32.xlu0 %v557, 32
    %v559 = vpop.permute.xlu0 %558
    %v564 = vunpack.c.l.b16 %v552
    %v565 = vunpack.c.l.b16 %v553
    %v566 = vunpack.c.l.b16 %v554
    %v567 = vunpack.c.l.b16 %v555
    %v568 = vpack.c.b16 %v565, %v564
    %v569 = vpack.c.b16 %v567, %v566
    %v573 = vsel %vm156, %v559, 0
    %575 = vmatpush.bf16.msra.mxu0 0
    %576 = vmatpush.bf16.msra.mxu0 0
    %577 = vmatpush.bf16.msra.mxu0 0
    %578 = vmatpush.bf16.msra.mxu0 0
    %579 = vmatpush.bf16.msra.mxu0 0
    %580 = vmatpush.bf16.msra.mxu0 0
    %581 = vmatpush.bf16.msra.mxu0 %v569
    %582 = vmatpush.bf16.msra.mxu0 %v568
    %583 = vmatmul.bf16.gmra.mxu0 %v573
    %v584 = vpop.f32.mrf.mxu0
    %v585 = vadd.f32 0.0, %v584
    %v586 = vpop.f32.mrf.mxu0
    %587 = vdwg.mxu0
    %v588 = vadd.f32 %v551, %v585
    %v589 = vxor.u32 %v588, 2147483648
    %v590 = vmul.f32 %v589, 1.442695
    %v591 = vpow.pop %v590
    %v592 = vadd.f32 %v591, 1.0
    %v593 = vrcp.pop %v592
    %v594 = vmul.f32 %v592, %v593
    %v595 = vsub.f32 1.0, %v594
    %v596 = vmul.f32 %v593, %v595
    %v597 = vadd.f32 %v593, %v596
    %vm598 = vweird.f32 %v592
    %vm599 = vweird.f32 %v593
    %vm600 = vmor %vm598, %vm599
    %v601 = vsel %vm600, %v593, %v597
    %v602 = vand.u32 2147483647, %v592
    %vm603 = vcmp.eq.f32.partialorder %v602, 8.507059e+37
    %v604 = vand.u32 %v592, 2147483648
    %v605 = vor.u32 1.1754944e-38, %v604
    %v606 = vsel %vm603, %v605, %v601
    %v607 = vmul.f32 1.0, %v606
    %v608 = vtanh.pop %v588
    %v609 = vmul.f32 %v607, %v536
    %611 = vrot.lane.b32.xlu0 %v608, 64
    %v612 = vpop.permute.xlu0 %611
    %v614 = vmul.f32 %v607, %v612
    %616 = vrot.lane.b32.xlu0 %v614, 32
    %v617 = vpop.permute.xlu0 %616
    %v619 = vadd.f32 %v609, %v617
    %v620 = vtanh.pop %v619
    %622 = vrot.lane.b32.xlu0 %v620, 64
    %v623 = vpop.permute.xlu0 %622
    %v625 = vmul.f32 %v607, %v623
    %v626 = vpack.c.bf16 %v625, %v625
    %628 = vrot.lane.b32.xlu0 %v626, 32
    %v629 = vpop.permute.xlu0 %628
    %s631 = scalar_lea.vmem [#allocation3], 20
    %632 = vst.msk [vmem:[%s631] sm:$0xf] %vm216, %v629
    %s633 = scalar_lea.vmem [#allocation2], 48
    %v634 = vld [vmem:[%s633] sm:$0xff]
    %v635 = vld [vmem:[%s2] sm:$0xf]
    %v636 = vld [vmem:[%s2 + $0x4] sm:$0xf]
    %v637 = vld [vmem:[%s2 + $0x8] sm:$0xf]
    %v638 = vld [vmem:[%s2 + $0xc] sm:$0xf]
    %v639 = vunpack.c.l.b16 %v626
    %v640 = vpack.c.b16 %v639, %v639
    %641 = vrot.lane.b32.xlu0 %v640, 32
    %v642 = vpop.permute.xlu0 %641
    %v647 = vunpack.c.l.b16 %v635
    %v648 = vunpack.c.l.b16 %v636
    %v649 = vunpack.c.l.b16 %v637
    %v650 = vunpack.c.l.b16 %v638
    %v651 = vpack.c.b16 %v648, %v647
    %v652 = vpack.c.b16 %v650, %v649
    %v656 = vsel %vm156, %v642, 0
    %658 = vmatpush.bf16.msra.mxu0 0
    %659 = vmatpush.bf16.msra.mxu0 0
    %660 = vmatpush.bf16.msra.mxu0 0
    %661 = vmatpush.bf16.msra.mxu0 0
    %662 = vmatpush.bf16.msra.mxu0 0
    %663 = vmatpush.bf16.msra.mxu0 0
    %664 = vmatpush.bf16.msra.mxu0 %v652
    %665 = vmatpush.bf16.msra.mxu0 %v651
    %666 = vmatmul.bf16.gmra.mxu0 %v656
    %v667 = vpop.f32.mrf.mxu0
    %v668 = vadd.f32 0.0, %v667
    %v669 = vpop.f32.mrf.mxu0
    %670 = vdwg.mxu0
    %v671 = vadd.f32 %v634, %v668
    %v672 = vxor.u32 %v671, 2147483648
    %v673 = vmul.f32 %v672, 1.442695
    %v674 = vpow.pop %v673
    %v675 = vadd.f32 %v674, 1.0
    %v676 = vrcp.pop %v675
    %v677 = vmul.f32 %v675, %v676
    %v678 = vsub.f32 1.0, %v677
    %v679 = vmul.f32 %v676, %v678
    %v680 = vadd.f32 %v676, %v679
    %vm681 = vweird.f32 %v675
    %vm682 = vweird.f32 %v676
    %vm683 = vmor %vm681, %vm682
    %v684 = vsel %vm683, %v676, %v680
    %v685 = vand.u32 2147483647, %v675
    %vm686 = vcmp.eq.f32.partialorder %v685, 8.507059e+37
    %v687 = vand.u32 %v675, 2147483648
    %v688 = vor.u32 1.1754944e-38, %v687
    %v689 = vsel %vm686, %v688, %v684
    %v690 = vmul.f32 1.0, %v689
    %v691 = vtanh.pop %v671
    %v692 = vmul.f32 %v690, %v619
    %694 = vrot.lane.b32.xlu0 %v691, 64
    %v695 = vpop.permute.xlu0 %694
    %v697 = vmul.f32 %v690, %v695
    %699 = vrot.lane.b32.xlu0 %v697, 32
    %v700 = vpop.permute.xlu0 %699
    %v702 = vadd.f32 %v692, %v700
    %v703 = vtanh.pop %v702
    %705 = vrot.lane.b32.xlu0 %v703, 64
    %v706 = vpop.permute.xlu0 %705
    %v708 = vmul.f32 %v690, %v706
    %v709 = vpack.c.bf16 %v708, %v708
    %711 = vrot.lane.b32.xlu0 %v709, 32
    %v712 = vpop.permute.xlu0 %711
    %s714 = scalar_lea.vmem [#allocation3], 24
    %715 = vst.msk [vmem:[%s714] sm:$0xf] %vm216, %v712
    %s716 = scalar_lea.vmem [#allocation2], 56
    %v717 = vld [vmem:[%s716] sm:$0xff]
    %v718 = vld [vmem:[%s2] sm:$0xf]
    %v719 = vld [vmem:[%s2 + $0x4] sm:$0xf]
    %v720 = vld [vmem:[%s2 + $0x8] sm:$0xf]
    %v721 = vld [vmem:[%s2 + $0xc] sm:$0xf]
    %v722 = vunpack.c.l.b16 %v709
    %v723 = vpack.c.b16 %v722, %v722
    %724 = vrot.lane.b32.xlu0 %v723, 32
    %v725 = vpop.permute.xlu0 %724
    %v730 = vunpack.c.l.b16 %v718
    %v731 = vunpack.c.l.b16 %v719
    %v732 = vunpack.c.l.b16 %v720
    %v733 = vunpack.c.l.b16 %v721
    %v734 = vpack.c.b16 %v731, %v730
    %v735 = vpack.c.b16 %v733, %v732
    %v739 = vsel %vm156, %v725, 0
    %741 = vmatpush.bf16.msra.mxu0 0
    %742 = vmatpush.bf16.msra.mxu0 0
    %743 = vmatpush.bf16.msra.mxu0 0
    %744 = vmatpush.bf16.msra.mxu0 0
    %745 = vmatpush.bf16.msra.mxu0 0
    %746 = vmatpush.bf16.msra.mxu0 0
    %747 = vmatpush.bf16.msra.mxu0 %v735
    %748 = vmatpush.bf16.msra.mxu0 %v734
    %749 = vmatmul.bf16.gmra.mxu0 %v739
    %v750 = vpop.f32.mrf.mxu0
    %v751 = vadd.f32 0.0, %v750
    %v752 = vpop.f32.mrf.mxu0
    %753 = vdwg.mxu0
    %v754 = vadd.f32 %v717, %v751
    %v755 = vxor.u32 %v754, 2147483648
    %v756 = vmul.f32 %v755, 1.442695
    %v757 = vpow.pop %v756
    %v758 = vadd.f32 %v757, 1.0
    %v759 = vrcp.pop %v758
    %v760 = vmul.f32 %v758, %v759
    %v761 = vsub.f32 1.0, %v760
    %v762 = vmul.f32 %v759, %v761
    %v763 = vadd.f32 %v759, %v762
    %vm764 = vweird.f32 %v758
    %vm765 = vweird.f32 %v759
    %vm766 = vmor %vm764, %vm765
    %v767 = vsel %vm766, %v759, %v763
    %v768 = vand.u32 2147483647, %v758
    %vm769 = vcmp.eq.f32.partialorder %v768, 8.507059e+37
    %v770 = vand.u32 %v758, 2147483648
    %v771 = vor.u32 1.1754944e-38, %v770
    %v772 = vsel %vm769, %v771, %v767
    %v773 = vmul.f32 1.0, %v772
    %v774 = vtanh.pop %v754
    %v775 = vmul.f32 %v773, %v702
    %777 = vrot.lane.b32.xlu0 %v774, 64
    %v778 = vpop.permute.xlu0 %777
    %v780 = vmul.f32 %v773, %v778
    %782 = vrot.lane.b32.xlu0 %v780, 32
    %v783 = vpop.permute.xlu0 %782
    %v785 = vadd.f32 %v775, %v783
    %v786 = vtanh.pop %v785
    %788 = vrot.lane.b32.xlu0 %v786, 64
    %v789 = vpop.permute.xlu0 %788
    %v791 = vmul.f32 %v773, %v789
    %v792 = vpack.c.bf16 %v791, %v791
    %794 = vrot.lane.b32.xlu0 %v792, 32
    %v795 = vpop.permute.xlu0 %794
    %s797 = scalar_lea.vmem [#allocation3], 28
    %798 = vst.msk [vmem:[%s797] sm:$0xf] %vm216, %v795
    %v799 = vld [vmem:[#allocation3] sm:$0xf]
    %v800 = vld [vmem:[#allocation3 + $0x4] sm:$0xf]
    %v801 = vld [vmem:[#allocation3 + $0x8] sm:$0xf]
    %v802 = vld [vmem:[#allocation3 + $0xc] sm:$0xf]
    %v803 = vld [vmem:[#allocation3 + $0x10] sm:$0xf]
    %v804 = vld [vmem:[#allocation3 + $0x14] sm:$0xf]
    %v805 = vld [vmem:[#allocation3 + $0x18] sm:$0xf]
    %v806 = vld [vmem:[#allocation3 + $0x1c] sm:$0xf]
    %v807 = vld [vmem:[%s4] sm:$0xf]
    %v808 = vld [vmem:[%s4 + $0x4] sm:$0xf]
    %v809 = vld [vmem:[%s4 + $0x8] sm:$0xf]
    %v810 = vld [vmem:[%s4 + $0xc] sm:$0xf]
    %v811 = vld [vmem:[%s6] sm:$0x1]
    %v813 = vperm.slane %v811, 0
    %v823 = vunpack.c.l.b16 %v799
    %v824 = vunpack.c.l.b16 %v800
    %v825 = vunpack.c.l.b16 %v801
    %v826 = vunpack.c.l.b16 %v802
    %v827 = vunpack.c.l.b16 %v803
    %v828 = vunpack.c.l.b16 %v804
    %v829 = vunpack.c.l.b16 %v805
    %v830 = vunpack.c.l.b16 %v806
    %v831 = vpack.c.b16 %v824, %v823
    %v832 = vpack.c.b16 %v826, %v825
    %v833 = vpack.c.b16 %v828, %v827
    %v834 = vpack.c.b16 %v830, %v829
    %v839 = vunpack.c.l.b16 %v807
    %v840 = vunpack.c.l.b16 %v808
    %v841 = vunpack.c.l.b16 %v809
    %v842 = vunpack.c.l.b16 %v810
    %v843 = vpack.c.b16 %v840, %v839
    %v844 = vpack.c.b16 %v842, %v841
    %v848 = vsel %vm156, %v831, 0
    %v851 = vsel %vm156, %v832, 0
    %v854 = vsel %vm156, %v833, 0
    %v857 = vsel %vm156, %v834, 0
    %859 = vmatpush.bf16.msra.mxu0 0
    %860 = vmatpush.bf16.msra.mxu0 0
    %861 = vmatpush.bf16.msra.mxu0 0
    %862 = vmatpush.bf16.msra.mxu0 0
    %863 = vmatpush.bf16.msra.mxu0 0
    %864 = vmatpush.bf16.msra.mxu0 0
    %865 = vmatpush.bf16.msra.mxu0 %v844
    %866 = vmatpush.bf16.msra.mxu0 %v843
    %867 = vmatmul.bf16.gmra.mxu0 %v848
    %v868 = vpop.f32.mrf.mxu0
    %v869 = vadd.f32 %v813, %v868
    %v870 = vpop.f32.mrf.mxu0
    %v871 = vadd.f32 %v813, %v870
    %872 = vmatmul.bf16.gmra.mxu0 %v851
    %v873 = vpop.f32.mrf.mxu0
    %v874 = vadd.f32 %v813, %v873
    %v875 = vpop.f32.mrf.mxu0
    %v876 = vadd.f32 %v813, %v875
    %877 = vmatmul.bf16.gmra.mxu0 %v854
    %v878 = vpop.f32.mrf.mxu0
    %v879 = vadd.f32 %v813, %v878
    %v880 = vpop.f32.mrf.mxu0
    %v881 = vadd.f32 %v813, %v880
    %882 = vmatmul.bf16.gmra.mxu0 %v857
    %v883 = vpop.f32.mrf.mxu0
    %v884 = vadd.f32 %v813, %v883
    %v885 = vpop.f32.mrf.mxu0
    %v886 = vadd.f32 %v813, %v885
    %887 = vdwg.mxu0
    %888 = vst [vmem:[#allocation2] sm:$0xff] %v869
    %889 = vst [vmem:[#allocation2 + $0x8] sm:$0xff] %v871
    %890 = vst [vmem:[#allocation2 + $0x10] sm:$0xff] %v874
    %891 = vst [vmem:[#allocation2 + $0x18] sm:$0xff] %v876
    %892 = vst [vmem:[#allocation2 + $0x20] sm:$0xff] %v879
    %893 = vst [vmem:[#allocation2 + $0x28] sm:$0xff] %v881
    %894 = vst [vmem:[#allocation2 + $0x30] sm:$0xff] %v884
    %895 = vst [vmem:[#allocation2 + $0x38] sm:$0xff] %v886
    %v896 = vld [vmem:[#allocation2] sm:$0xff]
    %v897 = vld [vmem:[%s5] sm:$0xf]
    %v898 = vld [vmem:[%s5 + $0x4] sm:$0xf]
    %v899 = vld [vmem:[%s5 + $0x8] sm:$0xf]
    %v900 = vld [vmem:[%s5 + $0xc] sm:$0xf]
    %v905 = vunpack.c.l.b16 %v897
    %v906 = vunpack.c.l.b16 %v898
    %v907 = vunpack.c.l.b16 %v899
    %v908 = vunpack.c.l.b16 %v900
    %v909 = vpack.c.b16 %v906, %v905
    %v910 = vpack.c.b16 %v908, %v907
    %913 = vmatpush.bf16.msra.mxu0 0
    %914 = vmatpush.bf16.msra.mxu0 0
    %915 = vmatpush.bf16.msra.mxu0 0
    %916 = vmatpush.bf16.msra.mxu0 0
    %917 = vmatpush.bf16.msra.mxu0 0
    %918 = vmatpush.bf16.msra.mxu0 0
    %919 = vmatpush.bf16.msra.mxu0 %v910
    %920 = vmatpush.bf16.msra.mxu0 %v909
    %921 = vmatmul.bf16.gmra.mxu0 %v158
    %v922 = vpop.f32.mrf.mxu0
    %v923 = vadd.f32 0.0, %v922
    %v924 = vpop.f32.mrf.mxu0
    %925 = vdwg.mxu0
    %v926 = vadd.f32 %v896, %v923
    %v927 = vxor.u32 %v926, 2147483648
    %v928 = vmul.f32 %v927, 1.442695
    %v929 = vpow.pop %v928
    %v930 = vadd.f32 %v929, 1.0
    %v931 = vrcp.pop %v930
    %v932 = vmul.f32 %v930, %v931
    %v933 = vsub.f32 1.0, %v932
    %v934 = vmul.f32 %v931, %v933
    %v935 = vadd.f32 %v931, %v934
    %vm936 = vweird.f32 %v930
    %vm937 = vweird.f32 %v931
    %vm938 = vmor %vm936, %vm937
    %v939 = vsel %vm938, %v931, %v935
    %v940 = vand.u32 2147483647, %v930
    %vm941 = vcmp.eq.f32.partialorder %v940, 8.507059e+37
    %v942 = vand.u32 %v930, 2147483648
    %v943 = vor.u32 1.1754944e-38, %v942
    %v944 = vsel %vm941, %v943, %v939
    %v945 = vmul.f32 1.0, %v944
    %v946 = vtanh.pop %v926
    %v947 = vmul.f32 %v945, 0.0
    %949 = vrot.lane.b32.xlu0 %v946, 64
    %v950 = vpop.permute.xlu0 %949
    %v952 = vmul.f32 %v945, %v950
    %954 = vrot.lane.b32.xlu0 %v952, 32
    %v955 = vpop.permute.xlu0 %954
    %v957 = vadd.f32 %v947, %v955
    %v958 = vtanh.pop %v957
    %960 = vrot.lane.b32.xlu0 %v958, 64
    %v961 = vpop.permute.xlu0 %960
    %v963 = vmul.f32 %v945, %v961
    %v964 = vpack.c.bf16 %v963, %v963
    %966 = vrot.lane.b32.xlu0 %v964, 32
    %v967 = vpop.permute.xlu0 %966
    %969 = vst.msk [vmem:[#allocation3] sm:$0xf] %vm216, %v967
    %v970 = vld [vmem:[%s218] sm:$0xff]
    %v971 = vld [vmem:[%s5] sm:$0xf]
    %v972 = vld [vmem:[%s5 + $0x4] sm:$0xf]
    %v973 = vld [vmem:[%s5 + $0x8] sm:$0xf]
    %v974 = vld [vmem:[%s5 + $0xc] sm:$0xf]
    %v975 = vunpack.c.l.b16 %v964
    %v976 = vpack.c.b16 %v975, %v975
    %977 = vrot.lane.b32.xlu0 %v976, 32
    %v978 = vpop.permute.xlu0 %977
    %v983 = vunpack.c.l.b16 %v971
    %v984 = vunpack.c.l.b16 %v972
    %v985 = vunpack.c.l.b16 %v973
    %v986 = vunpack.c.l.b16 %v974
    %v987 = vpack.c.b16 %v984, %v983
    %v988 = vpack.c.b16 %v986, %v985
    %v992 = vsel %vm156, %v978, 0
    %994 = vmatpush.bf16.msra.mxu0 0
    %995 = vmatpush.bf16.msra.mxu0 0
    %996 = vmatpush.bf16.msra.mxu0 0
    %997 = vmatpush.bf16.msra.mxu0 0
    %998 = vmatpush.bf16.msra.mxu0 0
    %999 = vmatpush.bf16.msra.mxu0 0
    %1000 = vmatpush.bf16.msra.mxu0 %v988
    %1001 = vmatpush.bf16.msra.mxu0 %v987
    %1002 = vmatmul.bf16.gmra.mxu0 %v992
    %v1003 = vpop.f32.mrf.mxu0
    %v1004 = vadd.f32 0.0, %v1003
    %v1005 = vpop.f32.mrf.mxu0
    %1006 = vdwg.mxu0
    %v1007 = vadd.f32 %v970, %v1004
    %v1008 = vxor.u32 %v1007, 2147483648
    %v1009 = vmul.f32 %v1008, 1.442695
    %v1010 = vpow.pop %v1009
    %v1011 = vadd.f32 %v1010, 1.0
    %v1012 = vrcp.pop %v1011
    %v1013 = vmul.f32 %v1011, %v1012
    %v1014 = vsub.f32 1.0, %v1013
    %v1015 = vmul.f32 %v1012, %v1014
    %v1016 = vadd.f32 %v1012, %v1015
    %vm1017 = vweird.f32 %v1011
    %vm1018 = vweird.f32 %v1012
    %vm1019 = vmor %vm1017, %vm1018
    %v1020 = vsel %vm1019, %v1012, %v1016
    %v1021 = vand.u32 2147483647, %v1011
    %vm1022 = vcmp.eq.f32.partialorder %v1021, 8.507059e+37
    %v1023 = vand.u32 %v1011, 2147483648
    %v1024 = vor.u32 1.1754944e-38, %v1023
    %v1025 = vsel %vm1022, %v1024, %v1020
    %v1026 = vmul.f32 1.0, %v1025
    %v1027 = vtanh.pop %v1007
    %v1028 = vmul.f32 %v1026, %v957
    %1030 = vrot.lane.b32.xlu0 %v1027, 64
    %v1031 = vpop.permute.xlu0 %1030
    %v1033 = vmul.f32 %v1026, %v1031
    %1035 = vrot.lane.b32.xlu0 %v1033, 32
    %v1036 = vpop.permute.xlu0 %1035
    %v1038 = vadd.f32 %v1028, %v1036
    %v1039 = vtanh.pop %v1038
    %1041 = vrot.lane.b32.xlu0 %v1039, 64
    %v1042 = vpop.permute.xlu0 %1041
    %v1044 = vmul.f32 %v1026, %v1042
    %v1045 = vpack.c.bf16 %v1044, %v1044
    %1047 = vrot.lane.b32.xlu0 %v1045, 32
    %v1048 = vpop.permute.xlu0 %1047
    %1050 = vst.msk [vmem:[%s299] sm:$0xf] %vm216, %v1048
    %v1051 = vld [vmem:[%s301] sm:$0xff]
    %v1052 = vld [vmem:[%s5] sm:$0xf]
    %v1053 = vld [vmem:[%s5 + $0x4] sm:$0xf]
    %v1054 = vld [vmem:[%s5 + $0x8] sm:$0xf]
    %v1055 = vld [vmem:[%s5 + $0xc] sm:$0xf]
    %v1056 = vunpack.c.l.b16 %v1045
    %v1057 = vpack.c.b16 %v1056, %v1056
    %1058 = vrot.lane.b32.xlu0 %v1057, 32
    %v1059 = vpop.permute.xlu0 %1058
    %v1064 = vunpack.c.l.b16 %v1052
    %v1065 = vunpack.c.l.b16 %v1053
    %v1066 = vunpack.c.l.b16 %v1054
    %v1067 = vunpack.c.l.b16 %v1055
    %v1068 = vpack.c.b16 %v1065, %v1064
    %v1069 = vpack.c.b16 %v1067, %v1066
    %v1073 = vsel %vm156, %v1059, 0
    %1075 = vmatpush.bf16.msra.mxu0 0
    %1076 = vmatpush.bf16.msra.mxu0 0
    %1077 = vmatpush.bf16.msra.mxu0 0
    %1078 = vmatpush.bf16.msra.mxu0 0
    %1079 = vmatpush.bf16.msra.mxu0 0
    %1080 = vmatpush.bf16.msra.mxu0 0
    %1081 = vmatpush.bf16.msra.mxu0 %v1069
    %1082 = vmatpush.bf16.msra.mxu0 %v1068
    %1083 = vmatmul.bf16.gmra.mxu0 %v1073
    %v1084 = vpop.f32.mrf.mxu0
    %v1085 = vadd.f32 0.0, %v1084
    %v1086 = vpop.f32.mrf.mxu0
    %1087 = vdwg.mxu0
    %v1088 = vadd.f32 %v1051, %v1085
    %v1089 = vxor.u32 %v1088, 2147483648
    %v1090 = vmul.f32 %v1089, 1.442695
    %v1091 = vpow.pop %v1090
    %v1092 = vadd.f32 %v1091, 1.0
    %v1093 = vrcp.pop %v1092
    %v1094 = vmul.f32 %v1092, %v1093
    %v1095 = vsub.f32 1.0, %v1094
    %v1096 = vmul.f32 %v1093, %v1095
    %v1097 = vadd.f32 %v1093, %v1096
    %vm1098 = vweird.f32 %v1092
    %vm1099 = vweird.f32 %v1093
    %vm1100 = vmor %vm1098, %vm1099
    %v1101 = vsel %vm1100, %v1093, %v1097
    %v1102 = vand.u32 2147483647, %v1092
    %vm1103 = vcmp.eq.f32.partialorder %v1102, 8.507059e+37
    %v1104 = vand.u32 %v1092, 2147483648
    %v1105 = vor.u32 1.1754944e-38, %v1104
    %v1106 = vsel %vm1103, %v1105, %v1101
    %v1107 = vmul.f32 1.0, %v1106
    %v1108 = vtanh.pop %v1088
    %v1109 = vmul.f32 %v1107, %v1038
    %1111 = vrot.lane.b32.xlu0 %v1108, 64
    %v1112 = vpop.permute.xlu0 %1111
    %v1114 = vmul.f32 %v1107, %v1112
    %1116 = vrot.lane.b32.xlu0 %v1114, 32
    %v1117 = vpop.permute.xlu0 %1116
    %v1119 = vadd.f32 %v1109, %v1117
    %v1120 = vtanh.pop %v1119
    %1122 = vrot.lane.b32.xlu0 %v1120, 64
    %v1123 = vpop.permute.xlu0 %1122
    %v1125 = vmul.f32 %v1107, %v1123
    %v1126 = vpack.c.bf16 %v1125, %v1125
    %1128 = vrot.lane.b32.xlu0 %v1126, 32
    %v1129 = vpop.permute.xlu0 %1128
    %1131 = vst.msk [vmem:[%s382] sm:$0xf] %vm216, %v1129
    %v1132 = vld [vmem:[%s384] sm:$0xff]
    %v1133 = vld [vmem:[%s5] sm:$0xf]
    %v1134 = vld [vmem:[%s5 + $0x4] sm:$0xf]
    %v1135 = vld [vmem:[%s5 + $0x8] sm:$0xf]
    %v1136 = vld [vmem:[%s5 + $0xc] sm:$0xf]
    %v1137 = vunpack.c.l.b16 %v1126
    %v1138 = vpack.c.b16 %v1137, %v1137
    %1139 = vrot.lane.b32.xlu0 %v1138, 32
    %v1140 = vpop.permute.xlu0 %1139
    %v1145 = vunpack.c.l.b16 %v1133
    %v1146 = vunpack.c.l.b16 %v1134
    %v1147 = vunpack.c.l.b16 %v1135
    %v1148 = vunpack.c.l.b16 %v1136
    %v1149 = vpack.c.b16 %v1146, %v1145
    %v1150 = vpack.c.b16 %v1148, %v1147
    %v1154 = vsel %vm156, %v1140, 0
    %1156 = vmatpush.bf16.msra.mxu0 0
    %1157 = vmatpush.bf16.msra.mxu0 0
    %1158 = vmatpush.bf16.msra.mxu0 0
    %1159 = vmatpush.bf16.msra.mxu0 0
    %1160 = vmatpush.bf16.msra.mxu0 0
    %1161 = vmatpush.bf16.msra.mxu0 0
    %1162 = vmatpush.bf16.msra.mxu0 %v1150
    %1163 = vmatpush.bf16.msra.mxu0 %v1149
    %1164 = vmatmul.bf16.gmra.mxu0 %v1154
    %v1165 = vpop.f32.mrf.mxu0
    %v1166 = vadd.f32 0.0, %v1165
    %v1167 = vpop.f32.mrf.mxu0
    %1168 = vdwg.mxu0
    %v1169 = vadd.f32 %v1132, %v1166
    %v1170 = vxor.u32 %v1169, 2147483648
    %v1171 = vmul.f32 %v1170, 1.442695
    %v1172 = vpow.pop %v1171
    %v1173 = vadd.f32 %v1172, 1.0
    %v1174 = vrcp.pop %v1173
    %v1175 = vmul.f32 %v1173, %v1174
    %v1176 = vsub.f32 1.0, %v1175
    %v1177 = vmul.f32 %v1174, %v1176
    %v1178 = vadd.f32 %v1174, %v1177
    %vm1179 = vweird.f32 %v1173
    %vm1180 = vweird.f32 %v1174
    %vm1181 = vmor %vm1179, %vm1180
    %v1182 = vsel %vm1181, %v1174, %v1178
    %v1183 = vand.u32 2147483647, %v1173
    %vm1184 = vcmp.eq.f32.partialorder %v1183, 8.507059e+37
    %v1185 = vand.u32 %v1173, 2147483648
    %v1186 = vor.u32 1.1754944e-38, %v1185
    %v1187 = vsel %vm1184, %v1186, %v1182
    %v1188 = vmul.f32 1.0, %v1187
    %v1189 = vtanh.pop %v1169
    %v1190 = vmul.f32 %v1188, %v1119
    %1192 = vrot.lane.b32.xlu0 %v1189, 64
    %v1193 = vpop.permute.xlu0 %1192
    %v1195 = vmul.f32 %v1188, %v1193
    %1197 = vrot.lane.b32.xlu0 %v1195, 32
    %v1198 = vpop.permute.xlu0 %1197
    %v1200 = vadd.f32 %v1190, %v1198
    %v1201 = vtanh.pop %v1200
    %1203 = vrot.lane.b32.xlu0 %v1201, 64
    %v1204 = vpop.permute.xlu0 %1203
    %v1206 = vmul.f32 %v1188, %v1204
    %v1207 = vpack.c.bf16 %v1206, %v1206
    %1209 = vrot.lane.b32.xlu0 %v1207, 32
    %v1210 = vpop.permute.xlu0 %1209
    %1212 = vst.msk [vmem:[%s465] sm:$0xf] %vm216, %v1210
    %v1213 = vld [vmem:[%s467] sm:$0xff]
    %v1214 = vld [vmem:[%s5] sm:$0xf]
    %v1215 = vld [vmem:[%s5 + $0x4] sm:$0xf]
    %v1216 = vld [vmem:[%s5 + $0x8] sm:$0xf]
    %v1217 = vld [vmem:[%s5 + $0xc] sm:$0xf]
    %v1218 = vunpack.c.l.b16 %v1207
    %v1219 = vpack.c.b16 %v1218, %v1218
    %1220 = vrot.lane.b32.xlu0 %v1219, 32
    %v1221 = vpop.permute.xlu0 %1220
    %v1226 = vunpack.c.l.b16 %v1214
    %v1227 = vunpack.c.l.b16 %v1215
    %v1228 = vunpack.c.l.b16 %v1216
    %v1229 = vunpack.c.l.b16 %v1217
    %v1230 = vpack.c.b16 %v1227, %v1226
    %v1231 = vpack.c.b16 %v1229, %v1228
    %v1235 = vsel %vm156, %v1221, 0
    %1237 = vmatpush.bf16.msra.mxu0 0
    %1238 = vmatpush.bf16.msra.mxu0 0
    %1239 = vmatpush.bf16.msra.mxu0 0
    %1240 = vmatpush.bf16.msra.mxu0 0
    %1241 = vmatpush.bf16.msra.mxu0 0
    %1242 = vmatpush.bf16.msra.mxu0 0
    %1243 = vmatpush.bf16.msra.mxu0 %v1231
    %1244 = vmatpush.bf16.msra.mxu0 %v1230
    %1245 = vmatmul.bf16.gmra.mxu0 %v1235
    %v1246 = vpop.f32.mrf.mxu0
    %v1247 = vadd.f32 0.0, %v1246
    %v1248 = vpop.f32.mrf.mxu0
    %1249 = vdwg.mxu0
    %v1250 = vadd.f32 %v1213, %v1247
    %v1251 = vxor.u32 %v1250, 2147483648
    %v1252 = vmul.f32 %v1251, 1.442695
    %v1253 = vpow.pop %v1252
    %v1254 = vadd.f32 %v1253, 1.0
    %v1255 = vrcp.pop %v1254
    %v1256 = vmul.f32 %v1254, %v1255
    %v1257 = vsub.f32 1.0, %v1256
    %v1258 = vmul.f32 %v1255, %v1257
    %v1259 = vadd.f32 %v1255, %v1258
    %vm1260 = vweird.f32 %v1254
    %vm1261 = vweird.f32 %v1255
    %vm1262 = vmor %vm1260, %vm1261
    %v1263 = vsel %vm1262, %v1255, %v1259
    %v1264 = vand.u32 2147483647, %v1254
    %vm1265 = vcmp.eq.f32.partialorder %v1264, 8.507059e+37
    %v1266 = vand.u32 %v1254, 2147483648
    %v1267 = vor.u32 1.1754944e-38, %v1266
    %v1268 = vsel %vm1265, %v1267, %v1263
    %v1269 = vmul.f32 1.0, %v1268
    %v1270 = vtanh.pop %v1250
    %v1271 = vmul.f32 %v1269, %v1200
    %1273 = vrot.lane.b32.xlu0 %v1270, 64
    %v1274 = vpop.permute.xlu0 %1273
    %v1276 = vmul.f32 %v1269, %v1274
    %1278 = vrot.lane.b32.xlu0 %v1276, 32
    %v1279 = vpop.permute.xlu0 %1278
    %v1281 = vadd.f32 %v1271, %v1279
    %v1282 = vtanh.pop %v1281
    %1284 = vrot.lane.b32.xlu0 %v1282, 64
    %v1285 = vpop.permute.xlu0 %1284
    %v1287 = vmul.f32 %v1269, %v1285
    %v1288 = vpack.c.bf16 %v1287, %v1287
    %1290 = vrot.lane.b32.xlu0 %v1288, 32
    %v1291 = vpop.permute.xlu0 %1290
    %1293 = vst.msk [vmem:[%s548] sm:$0xf] %vm216, %v1291
    %v1294 = vld [vmem:[%s550] sm:$0xff]
    %v1295 = vld [vmem:[%s5] sm:$0xf]
    %v1296 = vld [vmem:[%s5 + $0x4] sm:$0xf]
    %v1297 = vld [vmem:[%s5 + $0x8] sm:$0xf]
    %v1298 = vld [vmem:[%s5 + $0xc] sm:$0xf]
    %v1299 = vunpack.c.l.b16 %v1288
    %v1300 = vpack.c.b16 %v1299, %v1299
    %1301 = vrot.lane.b32.xlu0 %v1300, 32
    %v1302 = vpop.permute.xlu0 %1301
    %v1307 = vunpack.c.l.b16 %v1295
    %v1308 = vunpack.c.l.b16 %v1296
    %v1309 = vunpack.c.l.b16 %v1297
    %v1310 = vunpack.c.l.b16 %v1298
    %v1311 = vpack.c.b16 %v1308, %v1307
    %v1312 = vpack.c.b16 %v1310, %v1309
    %v1316 = vsel %vm156, %v1302, 0
    %1318 = vmatpush.bf16.msra.mxu0 0
    %1319 = vmatpush.bf16.msra.mxu0 0
    %1320 = vmatpush.bf16.msra.mxu0 0
    %1321 = vmatpush.bf16.msra.mxu0 0
    %1322 = vmatpush.bf16.msra.mxu0 0
    %1323 = vmatpush.bf16.msra.mxu0 0
    %1324 = vmatpush.bf16.msra.mxu0 %v1312
    %1325 = vmatpush.bf16.msra.mxu0 %v1311
    %1326 = vmatmul.bf16.gmra.mxu0 %v1316
    %v1327 = vpop.f32.mrf.mxu0
    %v1328 = vadd.f32 0.0, %v1327
    %v1329 = vpop.f32.mrf.mxu0
    %1330 = vdwg.mxu0
    %v1331 = vadd.f32 %v1294, %v1328
    %v1332 = vxor.u32 %v1331, 2147483648
    %v1333 = vmul.f32 %v1332, 1.442695
    %v1334 = vpow.pop %v1333
    %v1335 = vadd.f32 %v1334, 1.0
    %v1336 = vrcp.pop %v1335
    %v1337 = vmul.f32 %v1335, %v1336
    %v1338 = vsub.f32 1.0, %v1337
    %v1339 = vmul.f32 %v1336, %v1338
    %v1340 = vadd.f32 %v1336, %v1339
    %vm1341 = vweird.f32 %v1335
    %vm1342 = vweird.f32 %v1336
    %vm1343 = vmor %vm1341, %vm1342
    %v1344 = vsel %vm1343, %v1336, %v1340
    %v1345 = vand.u32 2147483647, %v1335
    %vm1346 = vcmp.eq.f32.partialorder %v1345, 8.507059e+37
    %v1347 = vand.u32 %v1335, 2147483648
    %v1348 = vor.u32 1.1754944e-38, %v1347
    %v1349 = vsel %vm1346, %v1348, %v1344
    %v1350 = vmul.f32 1.0, %v1349
    %v1351 = vtanh.pop %v1331
    %v1352 = vmul.f32 %v1350, %v1281
    %1354 = vrot.lane.b32.xlu0 %v1351, 64
    %v1355 = vpop.permute.xlu0 %1354
    %v1357 = vmul.f32 %v1350, %v1355
    %1359 = vrot.lane.b32.xlu0 %v1357, 32
    %v1360 = vpop.permute.xlu0 %1359
    %v1362 = vadd.f32 %v1352, %v1360
    %v1363 = vtanh.pop %v1362
    %1365 = vrot.lane.b32.xlu0 %v1363, 64
    %v1366 = vpop.permute.xlu0 %1365
    %v1368 = vmul.f32 %v1350, %v1366
    %v1369 = vpack.c.bf16 %v1368, %v1368
    %1371 = vrot.lane.b32.xlu0 %v1369, 32
    %v1372 = vpop.permute.xlu0 %1371
    %1374 = vst.msk [vmem:[%s631] sm:$0xf] %vm216, %v1372
    %v1375 = vld [vmem:[%s633] sm:$0xff]
    %v1376 = vld [vmem:[%s5] sm:$0xf]
    %v1377 = vld [vmem:[%s5 + $0x4] sm:$0xf]
    %v1378 = vld [vmem:[%s5 + $0x8] sm:$0xf]
    %v1379 = vld [vmem:[%s5 + $0xc] sm:$0xf]
    %v1380 = vunpack.c.l.b16 %v1369
    %v1381 = vpack.c.b16 %v1380, %v1380
    %1382 = vrot.lane.b32.xlu0 %v1381, 32
    %v1383 = vpop.permute.xlu0 %1382
    %v1388 = vunpack.c.l.b16 %v1376
    %v1389 = vunpack.c.l.b16 %v1377
    %v1390 = vunpack.c.l.b16 %v1378
    %v1391 = vunpack.c.l.b16 %v1379
    %v1392 = vpack.c.b16 %v1389, %v1388
    %v1393 = vpack.c.b16 %v1391, %v1390
    %v1397 = vsel %vm156, %v1383, 0
    %1399 = vmatpush.bf16.msra.mxu0 0
    %1400 = vmatpush.bf16.msra.mxu0 0
    %1401 = vmatpush.bf16.msra.mxu0 0
    %1402 = vmatpush.bf16.msra.mxu0 0
    %1403 = vmatpush.bf16.msra.mxu0 0
    %1404 = vmatpush.bf16.msra.mxu0 0
    %1405 = vmatpush.bf16.msra.mxu0 %v1393
    %1406 = vmatpush.bf16.msra.mxu0 %v1392
    %1407 = vmatmul.bf16.gmra.mxu0 %v1397
    %v1408 = vpop.f32.mrf.mxu0
    %v1409 = vadd.f32 0.0, %v1408
    %v1410 = vpop.f32.mrf.mxu0
    %1411 = vdwg.mxu0
    %v1412 = vadd.f32 %v1375, %v1409
    %v1413 = vxor.u32 %v1412, 2147483648
    %v1414 = vmul.f32 %v1413, 1.442695
    %v1415 = vpow.pop %v1414
    %v1416 = vadd.f32 %v1415, 1.0
    %v1417 = vrcp.pop %v1416
    %v1418 = vmul.f32 %v1416, %v1417
    %v1419 = vsub.f32 1.0, %v1418
    %v1420 = vmul.f32 %v1417, %v1419
    %v1421 = vadd.f32 %v1417, %v1420
    %vm1422 = vweird.f32 %v1416
    %vm1423 = vweird.f32 %v1417
    %vm1424 = vmor %vm1422, %vm1423
    %v1425 = vsel %vm1424, %v1417, %v1421
    %v1426 = vand.u32 2147483647, %v1416
    %vm1427 = vcmp.eq.f32.partialorder %v1426, 8.507059e+37
    %v1428 = vand.u32 %v1416, 2147483648
    %v1429 = vor.u32 1.1754944e-38, %v1428
    %v1430 = vsel %vm1427, %v1429, %v1425
    %v1431 = vmul.f32 1.0, %v1430
    %v1432 = vtanh.pop %v1412
    %v1433 = vmul.f32 %v1431, %v1362
    %1435 = vrot.lane.b32.xlu0 %v1432, 64
    %v1436 = vpop.permute.xlu0 %1435
    %v1438 = vmul.f32 %v1431, %v1436
    %1440 = vrot.lane.b32.xlu0 %v1438, 32
    %v1441 = vpop.permute.xlu0 %1440
    %v1443 = vadd.f32 %v1433, %v1441
    %v1444 = vtanh.pop %v1443
    %1446 = vrot.lane.b32.xlu0 %v1444, 64
    %v1447 = vpop.permute.xlu0 %1446
    %v1449 = vmul.f32 %v1431, %v1447
    %v1450 = vpack.c.bf16 %v1449, %v1449
    %1452 = vrot.lane.b32.xlu0 %v1450, 32
    %v1453 = vpop.permute.xlu0 %1452
    %1455 = vst.msk [vmem:[%s714] sm:$0xf] %vm216, %v1453
    %v1456 = vld [vmem:[%s716] sm:$0xff]
    %v1457 = vld [vmem:[%s5] sm:$0xf]
    %v1458 = vld [vmem:[%s5 + $0x4] sm:$0xf]
    %v1459 = vld [vmem:[%s5 + $0x8] sm:$0xf]
    %v1460 = vld [vmem:[%s5 + $0xc] sm:$0xf]
    %v1461 = vunpack.c.l.b16 %v1450
    %v1462 = vpack.c.b16 %v1461, %v1461
    %1463 = vrot.lane.b32.xlu0 %v1462, 32
    %v1464 = vpop.permute.xlu0 %1463
    %v1469 = vunpack.c.l.b16 %v1457
    %v1470 = vunpack.c.l.b16 %v1458
    %v1471 = vunpack.c.l.b16 %v1459
    %v1472 = vunpack.c.l.b16 %v1460
    %v1473 = vpack.c.b16 %v1470, %v1469
    %v1474 = vpack.c.b16 %v1472, %v1471
    %v1478 = vsel %vm156, %v1464, 0
    %1480 = vmatpush.bf16.msra.mxu0 0
    %1481 = vmatpush.bf16.msra.mxu0 0
    %1482 = vmatpush.bf16.msra.mxu0 0
    %1483 = vmatpush.bf16.msra.mxu0 0
    %1484 = vmatpush.bf16.msra.mxu0 0
    %1485 = vmatpush.bf16.msra.mxu0 0
    %1486 = vmatpush.bf16.msra.mxu0 %v1474
    %1487 = vmatpush.bf16.msra.mxu0 %v1473
    %1488 = vmatmul.bf16.gmra.mxu0 %v1478
    %v1489 = vpop.f32.mrf.mxu0
    %v1490 = vadd.f32 0.0, %v1489
    %v1491 = vpop.f32.mrf.mxu0
    %1492 = vdwg.mxu0
    %v1493 = vadd.f32 %v1456, %v1490
    %v1494 = vxor.u32 %v1493, 2147483648
    %v1495 = vmul.f32 %v1494, 1.442695
    %v1496 = vpow.pop %v1495
    %v1497 = vadd.f32 %v1496, 1.0
    %v1498 = vrcp.pop %v1497
    %v1499 = vmul.f32 %v1497, %v1498
    %v1500 = vsub.f32 1.0, %v1499
    %v1501 = vmul.f32 %v1498, %v1500
    %v1502 = vadd.f32 %v1498, %v1501
    %vm1503 = vweird.f32 %v1497
    %vm1504 = vweird.f32 %v1498
    %vm1505 = vmor %vm1503, %vm1504
    %v1506 = vsel %vm1505, %v1498, %v1502
    %v1507 = vand.u32 2147483647, %v1497
    %vm1508 = vcmp.eq.f32.partialorder %v1507, 8.507059e+37
    %v1509 = vand.u32 %v1497, 2147483648
    %v1510 = vor.u32 1.1754944e-38, %v1509
    %v1511 = vsel %vm1508, %v1510, %v1506
    %v1512 = vmul.f32 1.0, %v1511
    %v1513 = vtanh.pop %v1493
    %v1514 = vmul.f32 %v1512, %v1443
    %1516 = vrot.lane.b32.xlu0 %v1513, 64
    %v1517 = vpop.permute.xlu0 %1516
    %v1519 = vmul.f32 %v1512, %v1517
    %1521 = vrot.lane.b32.xlu0 %v1519, 32
    %v1522 = vpop.permute.xlu0 %1521
    %v1524 = vadd.f32 %v1514, %v1522
    %v1525 = vtanh.pop %v1524
    %1527 = vrot.lane.b32.xlu0 %v1525, 64
    %v1528 = vpop.permute.xlu0 %1527
    %v1530 = vmul.f32 %v1512, %v1528
    %v1531 = vpack.c.bf16 %v1530, %v1530
    %1533 = vrot.lane.b32.xlu0 %v1531, 32
    %v1534 = vpop.permute.xlu0 %1533
    %1536 = vst.msk [vmem:[%s797] sm:$0xf] %vm216, %v1534
    %v1537 = vld [vmem:[#allocation3] sm:$0xf]
    %v1538 = vld [vmem:[#allocation3 + $0x4] sm:$0xf]
    %v1539 = vld [vmem:[#allocation3 + $0x8] sm:$0xf]
    %v1540 = vld [vmem:[#allocation3 + $0xc] sm:$0xf]
    %v1541 = vld [vmem:[#allocation3 + $0x10] sm:$0xf]
    %v1542 = vld [vmem:[#allocation3 + $0x14] sm:$0xf]
    %v1543 = vld [vmem:[#allocation3 + $0x18] sm:$0xf]
    %v1544 = vld [vmem:[#allocation3 + $0x1c] sm:$0xf]
    %v1545 = vld [vmem:[%s7] sm:$0xf]
    %v1546 = vld [vmem:[%s7 + $0x4] sm:$0xf]
    %v1547 = vld [vmem:[%s7 + $0x8] sm:$0xf]
    %v1548 = vld [vmem:[%s7 + $0xc] sm:$0xf]
    %v1549 = vld [vmem:[%s8] sm:$0x1]
    %v1551 = vperm.slane %v1549, 0
    %v1561 = vunpack.c.l.b16 %v1537
    %v1562 = vunpack.c.l.b16 %v1538
    %v1563 = vunpack.c.l.b16 %v1539
    %v1564 = vunpack.c.l.b16 %v1540
    %v1565 = vunpack.c.l.b16 %v1541
    %v1566 = vunpack.c.l.b16 %v1542
    %v1567 = vunpack.c.l.b16 %v1543
    %v1568 = vunpack.c.l.b16 %v1544
    %v1569 = vpack.c.b16 %v1562, %v1561
    %v1570 = vpack.c.b16 %v1564, %v1563
    %v1571 = vpack.c.b16 %v1566, %v1565
    %v1572 = vpack.c.b16 %v1568, %v1567
    %v1577 = vunpack.c.l.b16 %v1545
    %v1578 = vunpack.c.l.b16 %v1546
    %v1579 = vunpack.c.l.b16 %v1547
    %v1580 = vunpack.c.l.b16 %v1548
    %v1581 = vpack.c.b16 %v1578, %v1577
    %v1582 = vpack.c.b16 %v1580, %v1579
    %v1586 = vsel %vm156, %v1569, 0
    %v1589 = vsel %vm156, %v1570, 0
    %v1592 = vsel %vm156, %v1571, 0
    %v1595 = vsel %vm156, %v1572, 0
    %1597 = vmatpush.bf16.msra.mxu0 0
    %1598 = vmatpush.bf16.msra.mxu0 0
    %1599 = vmatpush.bf16.msra.mxu0 0
    %1600 = vmatpush.bf16.msra.mxu0 0
    %1601 = vmatpush.bf16.msra.mxu0 0
    %1602 = vmatpush.bf16.msra.mxu0 0
    %1603 = vmatpush.bf16.msra.mxu0 %v1582
    %1604 = vmatpush.bf16.msra.mxu0 %v1581
    %1605 = vmatmul.bf16.gmra.mxu0 %v1586
    %v1606 = vpop.f32.mrf.mxu0
    %v1607 = vadd.f32 %v1551, %v1606
    %v1608 = vpop.f32.mrf.mxu0
    %v1609 = vadd.f32 %v1551, %v1608
    %1610 = vmatmul.bf16.gmra.mxu0 %v1589
    %v1611 = vpop.f32.mrf.mxu0
    %v1612 = vadd.f32 %v1551, %v1611
    %v1613 = vpop.f32.mrf.mxu0
    %v1614 = vadd.f32 %v1551, %v1613
    %1615 = vmatmul.bf16.gmra.mxu0 %v1592
    %v1616 = vpop.f32.mrf.mxu0
    %v1617 = vadd.f32 %v1551, %v1616
    %v1618 = vpop.f32.mrf.mxu0
    %v1619 = vadd.f32 %v1551, %v1618
    %1620 = vmatmul.bf16.gmra.mxu0 %v1595
    %v1621 = vpop.f32.mrf.mxu0
    %v1622 = vadd.f32 %v1551, %v1621
    %v1623 = vpop.f32.mrf.mxu0
    %v1624 = vadd.f32 %v1551, %v1623
    %1625 = vdwg.mxu0
    %v1626 = vmax.f32 %v1607, %v1617
    %v1627 = vmax.f32 %v1609, %v1619
    %v1628 = vmax.f32 %v1612, %v1622
    %v1629 = vmax.f32 %v1614, %v1624
    %v1630 = vmax.f32 %v1626, %v1627
    %v1631 = vmax.f32 %v1628, %v1629
    %v1632 = vmax.f32 %v1630, %v1631
    %v1633 = vsub.f32 %v1607, %v1632
    %v1634 = vsub.f32 %v1609, %v1632
    %v1635 = vsub.f32 %v1612, %v1632
    %v1636 = vsub.f32 %v1614, %v1632
    %v1637 = vsub.f32 %v1617, %v1632
    %v1638 = vsub.f32 %v1619, %v1632
    %v1639 = vsub.f32 %v1622, %v1632
    %v1640 = vsub.f32 %v1624, %v1632
    %v1641 = vmul.f32 %v1633, 1.442695
    %v1642 = vpow.pop %v1641
    %v1643 = vmul.f32 %v1634, 1.442695
    %v1644 = vpow.pop %v1643
    %v1645 = vmul.f32 %v1635, 1.442695
    %v1646 = vpow.pop %v1645
    %v1647 = vmul.f32 %v1636, 1.442695
    %v1648 = vpow.pop %v1647
    %v1649 = vmul.f32 %v1637, 1.442695
    %v1650 = vpow.pop %v1649
    %v1651 = vmul.f32 %v1638, 1.442695
    %v1652 = vpow.pop %v1651
    %v1653 = vmul.f32 %v1639, 1.442695
    %v1654 = vpow.pop %v1653
    %v1655 = vmul.f32 %v1640, 1.442695
    %v1656 = vpow.pop %v1655
    %v1657 = vadd.f32 %v1642, %v1644
    %v1658 = vadd.f32 %v1657, %v1646
    %v1659 = vadd.f32 %v1658, %v1648
    %v1660 = vadd.f32 %v1659, %v1650
    %v1661 = vadd.f32 %v1660, %v1652
    %v1662 = vadd.f32 %v1661, %v1654
    %v1663 = vadd.f32 %v1662, %v1656
    %v1664 = vrcp.pop %v1663
    %v1665 = vmul.f32 %v1642, %v1664
    %v1666 = vmul.f32 %v1644, %v1664
    %v1667 = vmul.f32 %v1646, %v1664
    %v1668 = vmul.f32 %v1648, %v1664
    %v1669 = vmul.f32 %v1650, %v1664
    %v1670 = vmul.f32 %v1652, %v1664
    %v1671 = vmul.f32 %v1654, %v1664
    %v1672 = vmul.f32 %v1656, %v1664
    %1673 = vst [vmem:[%s9] sm:$0xff] %v1665
    %1674 = vst [vmem:[%s9 + $0x8] sm:$0xff] %v1666
    %1675 = vst [vmem:[%s9 + $0x10] sm:$0xff] %v1667
    %1676 = vst [vmem:[%s9 + $0x18] sm:$0xff] %v1668
    %1677 = vst [vmem:[%s9 + $0x20] sm:$0xff] %v1669
    %1678 = vst [vmem:[%s9 + $0x28] sm:$0xff] %v1670
    %1679 = vst [vmem:[%s9 + $0x30] sm:$0xff] %v1671
    %1680 = vst [vmem:[%s9 + $0x38] sm:$0xff] %v1672
    // Predicated region
    $region42: #{lstm_classifier_forward.1} parent=1 // pred_check
      _
    $region43: #{lstm_classifier_forward.1} parent=1 // pred_check_branch
      %1682 = sbr.rel (0) target = $region45
    $region44: #{lstm_classifier_forward.1} parent=1 // pred_region
      _
    $region45: #{lstm_classifier_forward.1} parent=1 // pred_fallthru
      _
    // Predicated region
    $region46: #{lstm_classifier_forward.1} parent=1 // pred_check
      _
    $region47: #{lstm_classifier_forward.1} parent=1 // pred_check_branch
      %1684 = sbr.rel (0) target = $region49
    $region48: #{lstm_classifier_forward.1} parent=1 // pred_region
      _
    $region49: #{lstm_classifier_forward.1} parent=1 // pred_fallthru
      _
    %1685 = vsyncpa [#allocation5], 1

</llo_original>
